<compile_context>
chip_gen: v6e
topology: v6e:2x2x1
jax: 0.10.0
libtpu: 0.0.40
codegen_flags: <defaults>
</compile_context>

<pallas_src>
import functools

import jax
import jax.numpy as jnp
from jax.experimental import pallas as pl
from jax.experimental.pallas import tpu as pltpu

EPS = 1e-5
HIDDEN = 128
LANE = 128
VMEM_LIMIT = 32 * 1024 * 1024        # safe scoped-VMEM cap on v5e / v6e / v7x


# ---------------------------------------------------------------------------
# Kernels (feature-major: activations are (H, T), batch along lanes)
# ---------------------------------------------------------------------------
def _make_stats_kernel(tile_n, tiles_per_split, n_true, need_mask):
    """BN2 statistics: accumulate per-feature sum / sumsq of
    raw2 = W2^T @ relu(w1'*x + b1') over the batch.  The bias b2 is added
    analytically in the wrapper (it cancels in the variance)."""

    def kernel(x_ref, pk_ref, w2t_ref, s_ref, ss_ref):
        @pl.when(pl.program_id(1) == 0)
        def _init():
            s_ref[...] = jnp.zeros_like(s_ref)
            ss_ref[...] = jnp.zeros_like(ss_ref)

        x = x_ref[...]                                # (1, T) f32, lane-dense
        pk = pk_ref[...]                              # (H, 2) resident params
        w1p = pk[:, 0:1]                              # (H, 1)
        b1p = pk[:, 1:2]
        # Layer 1 + BN1 + ReLU: VPU broadcast FMA (in_features == 1, no MXU).
        # TODO(synk): on v6e/v7x this could run in packed bf16 on the VALU.
        h1 = jnp.maximum(w1p * x + b1p, 0.0)          # (H, T)
        if need_mask:
            # Zero padded samples so they drop out of the statistics.
            start = (pl.program_id(0) * tiles_per_split + pl.program_id(1)) * tile_n
            lane = jax.lax.broadcasted_iota(jnp.int32, x.shape, 1)
            h1 = h1 * ((start + lane) < n_true).astype(h1.dtype)
        # The only real GEMM: (H,H) bf16 @ (H,T) bf16 -> f32 on the MXU.
        raw = jnp.dot(w2t_ref[...], h1.astype(w2t_ref.dtype),
                      preferred_element_type=jnp.float32)      # (H, T)
        # TODO(synk): for very large N switch to centered / Chan-merged stats
        # instead of E[x^2]-E[x]^2 to avoid cancellation.
        s_ref[...] += jnp.sum(raw, axis=1, keepdims=True)      # lane reduce
        ss_ref[...] += jnp.sum(raw * raw, axis=1, keepdims=True)

    return kernel


def _forward_kernel(x_ref, pk_ref, w2s_ref, o_ref):
    """Fused forward for one batch tile; BN folded into the linear layers."""
    x = x_ref[...]                                    # (1, T) f32
    pk = pk_ref[...]                                  # (H, 5) resident params
    w1p, b1p = pk[:, 0:1], pk[:, 1:2]
    bias2, w3 = pk[:, 2:3], pk[:, 3:4]
    b3 = pk[0:1, 4:5]                                 # (1, 1) scalar bias
    h1 = jnp.maximum(w1p * x + b1p, 0.0)              # layer1 + BN1 + ReLU (VPU)
    h2 = jnp.dot(w2s_ref[...], h1.astype(w2s_ref.dtype),
                 preferred_element_type=jnp.float32) + bias2   # MXU + folded BN2
    h2 = jnp.maximum(h2, 0.0)                         # ReLU
    # Layer 3 (out_features == 1): VPU multiply + sublane reduce -> (1, T).
    out = jnp.sum(h2 * w3, axis=0, keepdims=True) + b3
    o_ref[...] = out.astype(o_ref.dtype)              # lane-dense store


# ---------------------------------------------------------------------------
# Wrapper
# ---------------------------------------------------------------------------
def _batch_tiling(n, tile_n_max):
    tile_n_max = max(LANE, (tile_n_max // LANE) * LANE)
    n_ceil = -(-n // LANE) * LANE
    if n_ceil <= tile_n_max:
        tile_n, num_splits = n_ceil, 1
    else:
        tile_n, num_splits = tile_n_max, 2     # 2 splits -> v7x megacore on stats
    chunk = tile_n * num_splits
    n_pad = -(-n // chunk) * chunk
    return tile_n, num_splits, n_pad


def mlp_forward(x, params, *, tile_n_max=8192, matmul_dtype=jnp.bfloat16):
    """Forward pass matching torch MLP (training-mode BN = batch statistics)."""
    (w1, b1, g1, be1, w2, b2, g2, be2, w3, b3) = params
    x = x.astype(jnp.float32)
    n = x.shape[0]
    h = w2.shape[0]

    tile_n, num_splits, n_pad = _batch_tiling(n, tile_n_max)
    tiles_per_split = n_pad // (tile_n * num_splits)
    total_tiles = n_pad // tile_n
    need_mask = n_pad != n
    n_f = jnp.float32(n)

    # Lane-dense batch layout: one contiguous (1, n_pad) f32 row in HBM.
    x_row = jnp.pad(jnp.reshape(x, (1, n)), ((0, 0), (0, n_pad - n)))

    # ---- BN1 folded analytically: h1[:, j] = w1[j]*x + b1[j] is affine in the
    #      scalar input, so per-feature batch mean/var follow from mean/var(x).
    mean_x = jnp.mean(x)
    var_x = jnp.var(x)                                   # biased, as in torch BN
    sc1 = g1 * jax.lax.rsqrt(w1 * w1 * var_x + EPS)
    sh1 = be1 - (w1 * mean_x + b1) * sc1
    w1p = w1 * sc1                                       # layer-1 weight, BN1 folded
    b1p = b1 * sc1 + sh1

    pack2 = jnp.stack([w1p, b1p], axis=1)                # (H, 2) resident params
    w2t = w2.T.astype(matmul_dtype)                      # (H, H) bf16, pre-transposed

    # ---- Pass 1: BN2 statistics (the only traversal besides the forward).
    stat_spec = pl.BlockSpec((None, h, 1), lambda c, i: (c, 0, 0))
    stat_shape = jax.ShapeDtypeStruct((num_splits, h, 1), jnp.float32)
    s_raw, ss_raw = pl.pallas_call(
        _make_stats_kernel(tile_n, tiles_per_split, n, need_mask),
        out_shape=(stat_shape, stat_shape),
        grid=(num_splits, tiles_per_split),
        in_specs=[
            pl.BlockSpec((1, tile_n), lambda c, i: (0, c * tiles_per_split + i)),
            pl.BlockSpec((h, 2), lambda c, i: (0, 0)),
            pl.BlockSpec((h, h), lambda c, i: (0, 0)),
        ],
        out_specs=(stat_spec, stat_spec),
        compiler_params=pltpu.CompilerParams(
            dimension_semantics=("parallel", "arbitrary"),
            vmem_limit_bytes=VMEM_LIMIT),
        cost_estimate=pl.CostEstimate(flops=2 * n_pad * h * h, transcendentals=0,
                                      bytes_accessed=4 * n_pad + 2 * h * h + 16 * h),
    )(x_row, pack2, w2t)
    s_raw = jnp.sum(s_raw, axis=0)[:, 0]                 # combine split partials -> (H,)
    ss_raw = jnp.sum(ss_raw, axis=0)[:, 0]

    # ---- Finalize BN2 (b2 cancels in the variance) and fold it into layer 2.
    mean_raw = s_raw / n_f
    var2 = jnp.maximum(ss_raw / n_f - mean_raw * mean_raw, 0.0)
    sc2 = g2 * jax.lax.rsqrt(var2 + EPS)
    sh2 = be2 - (mean_raw + b2) * sc2
    w2s = (w2.T * sc2[:, None]).astype(matmul_dtype)     # BN2 scale folded into W2
    bias2p = b2 * sc2 + sh2                              # BN2 shift + b2 folded
    b3_col = jnp.broadcast_to(jnp.reshape(b3, ()).astype(jnp.float32), (h,))
    pack3 = jnp.stack([w1p, b1p, bias2p, w3, b3_col], axis=1)   # (H, 5)

    # ---- Pass 2: fused forward, lane-dense (1, n_pad) output slab.
    out_row = pl.pallas_call(
        _forward_kernel,
        out_shape=jax.ShapeDtypeStruct((1, n_pad), jnp.float32),
        grid=(total_tiles,),
        in_specs=[
            pl.BlockSpec((1, tile_n), lambda i: (0, i)),
            pl.BlockSpec((h, 5), lambda i: (0, 0)),
            pl.BlockSpec((h, h), lambda i: (0, 0)),
        ],
        out_specs=pl.BlockSpec((1, tile_n), lambda i: (0, i)),
        compiler_params=pltpu.CompilerParams(
            dimension_semantics=("parallel",),
            vmem_limit_bytes=VMEM_LIMIT),
        cost_estimate=pl.CostEstimate(flops=2 * n_pad * h * h, transcendentals=0,
                                      bytes_accessed=8 * n_pad + 2 * h * h + 20 * h),
    )(x_row, pack3, w2s)

    return out_row[0, :n].reshape(n, 1)


# ---------------------------------------------------------------------------
# Params / reference
# ---------------------------------------------------------------------------
def init_params(key, hidden=HIDDEN):
    """Deterministic synthetic init (PyTorch-like uniform fan-in bounds)."""
    ks = jax.random.split(key, 6)

    def lin(kw, kb, fan_in, fan_out):
        bound = fan_in ** -0.5
        w = jax.random.uniform(kw, (fan_in, fan_out), jnp.float32, -bound, bound)
        b = jax.random.uniform(kb, (fan_out,), jnp.float32, -bound, bound)
        return w, b

    w1m, b1 = lin(ks[0], ks[1], 1, hidden)           # (1,H), (H,)
    w2, b2 = lin(ks[2], ks[3], hidden, hidden)       # (H,H) = (in,out), (H,)
    w3m, b3v = lin(ks[4], ks[5], hidden, 1)          # (H,1), (1,)
    w1 = w1m[0]                                      # (H,)
    w3 = w3m[:, 0]                                   # (H,)
    b3 = b3v[0]                                      # scalar
    g1 = jnp.ones((hidden,), jnp.float32)
    be1 = jnp.zeros((hidden,), jnp.float32)
    g2 = jnp.ones((hidden,), jnp.float32)
    be2 = jnp.zeros((hidden,), jnp.float32)
    return (w1, b1, g1, be1, w2, b2, g2, be2, w3, b3)


def mlp_reference(x, params, matmul_dtype=jnp.float32):
    """Pure-JAX reference (PyTorch training-mode BN: batch mean, biased var)."""
    (w1, b1, g1, be1, w2, b2, g2, be2, w3, b3) = params
    x = x.astype(jnp.float32)

    def bn(hh, g, b):
        m = jnp.mean(hh, axis=0, keepdims=True)
        v = jnp.mean((hh - m) ** 2, axis=0, keepdims=True)
        return (hh - m) * jax.lax.rsqrt(v + EPS) * g + b

    hh = jnp.maximum(bn(x * w1 + b1, g1, be1), 0.0)
    hh = jnp.dot(hh.astype(matmul_dtype), w2.astype(matmul_dtype),
                 preferred_element_type=jnp.float32) + b2
    hh = jnp.maximum(bn(hh, g2, be2), 0.0)
    return hh @ w3[:, None] + b3


if __name__ == "__main__":
    key = jax.random.PRNGKey(0)
    k_x, k_p = jax.random.split(key)

    N = 300                     # awkward batch: exercises padding + masked stats
    x = jax.random.normal(k_x, (N, 1), jnp.float32)
    params = init_params(k_p, hidden=HIDDEN)

    # Small tiles so the demo exercises the 2-split stats grid and pipelining.
    fwd = jax.jit(functools.partial(mlp_forward, tile_n_max=128,
                                    matmul_dtype=jnp.bfloat16))
    out = jax.block_until_ready(fwd(x, params))
    assert out.shape == (N, 1)

    ref_bf16 = mlp_reference(x, params, matmul_dtype=jnp.bfloat16)
    ref_f32 = mlp_reference(x, params, matmul_dtype=jnp.float32)
    assert jnp.allclose(out, ref_bf16, atol=3e-2, rtol=3e-2), "mismatch vs bf16 reference"
    assert jnp.allclose(out, ref_f32, atol=6e-2, rtol=6e-2), "mismatch vs f32 reference"

    print("KERNEL_OK")
</pallas_src>

<mosaic_0001>
module attributes {stable_mosaic.version = 11 : i64} {
  func.func @kernel(%arg0: i32, %arg1: i32, %arg2: memref<1x128xf32, #tpu.memory_space<vmem>>, %arg3: memref<128x2xf32, #tpu.memory_space<vmem>>, %arg4: memref<128x128xbf16, #tpu.memory_space<vmem>>, %arg5: memref<1x128x1xf32, #tpu.memory_space<vmem>>, %arg6: memref<1x128x1xf32, #tpu.memory_space<vmem>>) attributes {dimension_semantics = [#tpu.dimension_semantics<parallel>, #tpu.dimension_semantics<arbitrary>], iteration_bounds = array<i64: 2, 2>, scalar_prefetch = 0 : i64, scratch_operands = 0 : i64, tpu.core_type = #tpu.core_type<tc>, window_params = [{transform_indices = @transform_0, window_bounds = array<i64: 1, 128>}, {pipeline_mode = #tpu.pipeline_mode<synchronous>, transform_indices = @transform_1, window_bounds = array<i64: 128, 2>}, {pipeline_mode = #tpu.pipeline_mode<synchronous>, transform_indices = @transform_2, window_bounds = array<i64: 128, 128>}, {transform_indices = @transform_3, window_bounds = array<i64: 1, 128, 1>}, {transform_indices = @transform_4, window_bounds = array<i64: 1, 128, 1>}]} {
    %c0_i32 = arith.constant 0 : i32
    %0 = arith.cmpi eq, %arg1, %c0_i32 : i32
    %1 = arith.extui %0 : i1 to i32
    %c0_i32_0 = arith.constant 0 : i32
    %2 = arith.cmpi ne, %1, %c0_i32_0 : i32
    scf.if %2 {
      %cst_21 = arith.constant 0.000000e+00 : f32
      %46 = vector.broadcast %cst_21 : f32 to vector<128x1xf32>
      %c0_22 = arith.constant 0 : index
      %c0_23 = arith.constant 0 : index
      %c0_24 = arith.constant 0 : index
      %47 = vector.load %arg5[%c0_22, %c0_23, %c0_24] : memref<1x128x1xf32, #tpu.memory_space<vmem>>, vector<1x128x1xf32>
      %48 = vector.shape_cast %47 : vector<1x128x1xf32> to vector<128x1xf32>
      %49 = vector.shape_cast %46 : vector<128x1xf32> to vector<1x128x1xf32>
      tpu.vector_store %arg5[%c0_22, %c0_23, %c0_24], %49 {strides = array<i32>} : memref<1x128x1xf32, #tpu.memory_space<vmem>>, vector<1x128x1xf32>,
      %cst_25 = arith.constant 0.000000e+00 : f32
      %50 = vector.broadcast %cst_25 : f32 to vector<128x1xf32>
      %c0_26 = arith.constant 0 : index
      %c0_27 = arith.constant 0 : index
      %c0_28 = arith.constant 0 : index
      %51 = vector.load %arg6[%c0_26, %c0_27, %c0_28] : memref<1x128x1xf32, #tpu.memory_space<vmem>>, vector<1x128x1xf32>
      %52 = vector.shape_cast %51 : vector<1x128x1xf32> to vector<128x1xf32>
      %53 = vector.shape_cast %50 : vector<128x1xf32> to vector<1x128x1xf32>
      tpu.vector_store %arg6[%c0_26, %c0_27, %c0_28], %53 {strides = array<i32>} : memref<1x128x1xf32, #tpu.memory_space<vmem>>, vector<1x128x1xf32>,
    } else {
    }
    %c0 = arith.constant 0 : index
    %c0_1 = arith.constant 0 : index
    %3 = vector.load %arg2[%c0, %c0_1] : memref<1x128xf32, #tpu.memory_space<vmem>>, vector<1x128xf32>
    %c0_2 = arith.constant 0 : index
    %c0_3 = arith.constant 0 : index
    %4 = vector.load %arg3[%c0_2, %c0_3] : memref<128x2xf32, #tpu.memory_space<vmem>>, vector<128x2xf32>
    %5 = vector.extract_strided_slice %4 {offsets = [0, 0], sizes = [128, 1], strides = [1, 1]} : vector<128x2xf32> to vector<128x1xf32>
    %6 = vector.extract_strided_slice %4 {offsets = [0, 1], sizes = [128, 1], strides = [1, 1]} : vector<128x2xf32> to vector<128x1xf32>
    %7 = vector.broadcast %5 : vector<128x1xf32> to vector<128x128xf32>
    %8 = vector.broadcast %3 : vector<1x128xf32> to vector<128x128xf32>
    %9 = arith.mulf %7, %8 : vector<128x128xf32>
    %10 = vector.broadcast %6 : vector<128x1xf32> to vector<128x128xf32>
    %11 = arith.addf %9, %10 : vector<128x128xf32>
    %cst = arith.constant 0.000000e+00 : f32
    %12 = vector.broadcast %cst : f32 to vector<128x128xf32>
    %13 = arith.maximumf %11, %12 : vector<128x128xf32>
    %c2_i32 = arith.constant 2 : i32
    %14 = arith.muli %arg0, %c2_i32 : i32
    %15 = arith.addi %14, %arg1 : i32
    %c128_i32 = arith.constant 128 : i32
    %16 = arith.muli %15, %c128_i32 : i32
    %17 = tpu.iota {dimensions = array<i32: 1>} : vector<1x128xi32>
    %18 = vector.broadcast %16 : i32 to vector<1x128xi32>
    %19 = arith.addi %18, %17 : vector<1x128xi32>
    %c300_i32 = arith.constant 300 : i32
    %20 = vector.broadcast %c300_i32 : i32 to vector<1x128xi32>
    %21 = arith.cmpi slt, %19, %20 : vector<1x128xi32>
    %22 = arith.extui %21 : vector<1x128xi1> to vector<1x128xi32>
    %23 = arith.sitofp %22 : vector<1x128xi32> to vector<1x128xf32>
    %24 = vector.broadcast %23 : vector<1x128xf32> to vector<128x128xf32>
    %25 = arith.mulf %13, %24 : vector<128x128xf32>
    %c0_4 = arith.constant 0 : index
    %c0_5 = arith.constant 0 : index
    %26 = vector.load %arg4[%c0_4, %c0_5] : memref<128x128xbf16, #tpu.memory_space<vmem>>, vector<128x128xbf16>
    %27 = arith.truncf %25 : vector<128x128xf32> to vector<128x128xbf16>
    %cst_6 = arith.constant dense<0.000000e+00> : vector<128x128xf32>
    %28 = tpu.matmul %26, %27, %cst_6 {dimension_numbers = #tpu.dot_dimension_numbers<[1], [0], [0], [1], [0, 0, 1, 1], [], []>} : vector<128x128xbf16>, vector<128x128xbf16>, vector<128x128xf32> -> vector<128x128xf32>
    %c0_7 = arith.constant 0 : index
    %c0_8 = arith.constant 0 : index
    %c0_9 = arith.constant 0 : index
    %29 = vector.load %arg5[%c0_7, %c0_8, %c0_9] : memref<1x128x1xf32, #tpu.memory_space<vmem>>, vector<1x128x1xf32>
    %30 = vector.shape_cast %29 : vector<1x128x1xf32> to vector<128x1xf32>
    %cst_10 = arith.constant dense<0.000000e+00> : vector<128xf32>
    %31 = vector.multi_reduction <add>, %28, %cst_10 [1] : vector<128x128xf32> to vector<128xf32>
    %32 = vector.shape_cast %31 : vector<128xf32> to vector<128x1xf32>
    %33 = arith.addf %30, %32 : vector<128x1xf32>
    %c0_11 = arith.constant 0 : index
    %c0_12 = arith.constant 0 : index
    %c0_13 = arith.constant 0 : index
    %34 = vector.load %arg5[%c0_11, %c0_12, %c0_13] : memref<1x128x1xf32, #tpu.memory_space<vmem>>, vector<1x128x1xf32>
    %35 = vector.shape_cast %34 : vector<1x128x1xf32> to vector<128x1xf32>
    %36 = vector.shape_cast %33 : vector<128x1xf32> to vector<1x128x1xf32>
    tpu.vector_store %arg5[%c0_11, %c0_12, %c0_13], %36 {strides = array<i32>} : memref<1x128x1xf32, #tpu.memory_space<vmem>>, vector<1x128x1xf32>,
    %c0_14 = arith.constant 0 : index
    %c0_15 = arith.constant 0 : index
    %c0_16 = arith.constant 0 : index
    %37 = vector.load %arg6[%c0_14, %c0_15, %c0_16] : memref<1x128x1xf32, #tpu.memory_space<vmem>>, vector<1x128x1xf32>
    %38 = vector.shape_cast %37 : vector<1x128x1xf32> to vector<128x1xf32>
    %39 = arith.mulf %28, %28 : vector<128x128xf32>
    %cst_17 = arith.constant dense<0.000000e+00> : vector<128xf32>
    %40 = vector.multi_reduction <add>, %39, %cst_17 [1] : vector<128x128xf32> to vector<128xf32>
    %41 = vector.shape_cast %40 : vector<128xf32> to vector<128x1xf32>
    %42 = arith.addf %38, %41 : vector<128x1xf32>
    %c0_18 = arith.constant 0 : index
    %c0_19 = arith.constant 0 : index
    %c0_20 = arith.constant 0 : index
    %43 = vector.load %arg6[%c0_18, %c0_19, %c0_20] : memref<1x128x1xf32, #tpu.memory_space<vmem>>, vector<1x128x1xf32>
    %44 = vector.shape_cast %43 : vector<1x128x1xf32> to vector<128x1xf32>
    %45 = vector.shape_cast %42 : vector<128x1xf32> to vector<1x128x1xf32>
    tpu.vector_store %arg6[%c0_18, %c0_19, %c0_20], %45 {strides = array<i32>} : memref<1x128x1xf32, #tpu.memory_space<vmem>>, vector<1x128x1xf32>,
    return
  }
  func.func @transform_0(%arg0: i32, %arg1: i32) -> (i32, i32) {
    %c2_i32 = arith.constant 2 : i32
    %0 = arith.muli %arg0, %c2_i32 : i32
    %1 = arith.addi %0, %arg1 : i32
    %c0_i32 = arith.constant 0 : i32
    %c0_i32_0 = arith.constant 0 : i32
    return %c0_i32, %1 : i32, i32
  }
  func.func @transform_1(%arg0: i32, %arg1: i32) -> (i32, i32) {
    %c0_i32 = arith.constant 0 : i32
    %c0_i32_0 = arith.constant 0 : i32
    %c0_i32_1 = arith.constant 0 : i32
    return %c0_i32, %c0_i32_0 : i32, i32
  }
  func.func @transform_2(%arg0: i32, %arg1: i32) -> (i32, i32) {
    %c0_i32 = arith.constant 0 : i32
    %c0_i32_0 = arith.constant 0 : i32
    %c0_i32_1 = arith.constant 0 : i32
    return %c0_i32, %c0_i32_0 : i32, i32
  }
  func.func @transform_3(%arg0: i32, %arg1: i32) -> (i32, i32, i32) {
    %c0_i32 = arith.constant 0 : i32
    %c0_i32_0 = arith.constant 0 : i32
    %c0_i32_1 = arith.constant 0 : i32
    return %arg0, %c0_i32, %c0_i32_0 : i32, i32, i32
  }
  func.func @transform_4(%arg0: i32, %arg1: i32) -> (i32, i32, i32) {
    %c0_i32 = arith.constant 0 : i32
    %c0_i32_0 = arith.constant 0 : i32
    %c0_i32_1 = arith.constant 0 : i32
    return %arg0, %c0_i32, %c0_i32_0 : i32, i32, i32
  }
}

module attributes {stable_mosaic.version = 11 : i64} {
  func.func @_forward_kernel(%arg0: i32, %arg1: memref<1x128xf32, #tpu.memory_space<vmem>>, %arg2: memref<128x5xf32, #tpu.memory_space<vmem>>, %arg3: memref<128x128xbf16, #tpu.memory_space<vmem>>, %arg4: memref<1x128xf32, #tpu.memory_space<vmem>>) attributes {dimension_semantics = [#tpu.dimension_semantics<parallel>], iteration_bounds = array<i64: 4>, scalar_prefetch = 0 : i64, scratch_operands = 0 : i64, tpu.core_type = #tpu.core_type<tc>, window_params = [{transform_indices = @transform_0, window_bounds = array<i64: 1, 128>}, {pipeline_mode = #tpu.pipeline_mode<synchronous>, transform_indices = @transform_1, window_bounds = array<i64: 128, 5>}, {pipeline_mode = #tpu.pipeline_mode<synchronous>, transform_indices = @transform_2, window_bounds = array<i64: 128, 128>}, {transform_indices = @transform_3, window_bounds = array<i64: 1, 128>}]} {
    %c0 = arith.constant 0 : index
    %c0_0 = arith.constant 0 : index
    %0 = vector.load %arg1[%c0, %c0_0] : memref<1x128xf32, #tpu.memory_space<vmem>>, vector<1x128xf32>
    %c0_1 = arith.constant 0 : index
    %c0_2 = arith.constant 0 : index
    %1 = vector.load %arg2[%c0_1, %c0_2] : memref<128x5xf32, #tpu.memory_space<vmem>>, vector<128x5xf32>
    %2 = vector.extract_strided_slice %1 {offsets = [0, 0], sizes = [128, 1], strides = [1, 1]} : vector<128x5xf32> to vector<128x1xf32>
    %3 = vector.extract_strided_slice %1 {offsets = [0, 1], sizes = [128, 1], strides = [1, 1]} : vector<128x5xf32> to vector<128x1xf32>
    %4 = vector.extract_strided_slice %1 {offsets = [0, 2], sizes = [128, 1], strides = [1, 1]} : vector<128x5xf32> to vector<128x1xf32>
    %5 = vector.extract_strided_slice %1 {offsets = [0, 3], sizes = [128, 1], strides = [1, 1]} : vector<128x5xf32> to vector<128x1xf32>
    %6 = vector.extract_strided_slice %1 {offsets = [0, 4], sizes = [1, 1], strides = [1, 1]} : vector<128x5xf32> to vector<1x1xf32>
    %7 = vector.broadcast %2 : vector<128x1xf32> to vector<128x128xf32>
    %8 = vector.broadcast %0 : vector<1x128xf32> to vector<128x128xf32>
    %9 = arith.mulf %7, %8 : vector<128x128xf32>
    %10 = vector.broadcast %3 : vector<128x1xf32> to vector<128x128xf32>
    %11 = arith.addf %9, %10 : vector<128x128xf32>
    %cst = arith.constant 0.000000e+00 : f32
    %12 = vector.broadcast %cst : f32 to vector<128x128xf32>
    %13 = arith.maximumf %11, %12 : vector<128x128xf32>
    %c0_3 = arith.constant 0 : index
    %c0_4 = arith.constant 0 : index
    %14 = vector.load %arg3[%c0_3, %c0_4] : memref<128x128xbf16, #tpu.memory_space<vmem>>, vector<128x128xbf16>
    %15 = arith.truncf %13 : vector<128x128xf32> to vector<128x128xbf16>
    %cst_5 = arith.constant dense<0.000000e+00> : vector<128x128xf32>
    %16 = tpu.matmul %14, %15, %cst_5 {dimension_numbers = #tpu.dot_dimension_numbers<[1], [0], [0], [1], [0, 0, 1, 1], [], []>} : vector<128x128xbf16>, vector<128x128xbf16>, vector<128x128xf32> -> vector<128x128xf32>
    %17 = vector.broadcast %4 : vector<128x1xf32> to vector<128x128xf32>
    %18 = arith.addf %16, %17 : vector<128x128xf32>
    %cst_6 = arith.constant 0.000000e+00 : f32
    %19 = vector.broadcast %cst_6 : f32 to vector<128x128xf32>
    %20 = arith.maximumf %18, %19 : vector<128x128xf32>
    %21 = vector.broadcast %5 : vector<128x1xf32> to vector<128x128xf32>
    %22 = arith.mulf %20, %21 : vector<128x128xf32>
    %cst_7 = arith.constant dense<0.000000e+00> : vector<128xf32>
    %23 = vector.multi_reduction <add>, %22, %cst_7 [0] : vector<128x128xf32> to vector<128xf32>
    %24 = vector.shape_cast %23 : vector<128xf32> to vector<1x128xf32>
    %25 = vector.broadcast %6 : vector<1x1xf32> to vector<1x128xf32>
    %26 = arith.addf %24, %25 : vector<1x128xf32>
    %c0_8 = arith.constant 0 : index
    %c0_9 = arith.constant 0 : index
    %27 = vector.load %arg4[%c0_8, %c0_9] : memref<1x128xf32, #tpu.memory_space<vmem>>, vector<1x128xf32>
    tpu.vector_store %arg4[%c0_8, %c0_9], %26 {strides = array<i32>} : memref<1x128xf32, #tpu.memory_space<vmem>>, vector<1x128xf32>,
    return
  }
  func.func @transform_0(%arg0: i32) -> (i32, i32) {
    %c0_i32 = arith.constant 0 : i32
    %c0_i32_0 = arith.constant 0 : i32
    return %c0_i32, %arg0 : i32, i32
  }
  func.func @transform_1(%arg0: i32) -> (i32, i32) {
    %c0_i32 = arith.constant 0 : i32
    %c0_i32_0 = arith.constant 0 : i32
    %c0_i32_1 = arith.constant 0 : i32
    return %c0_i32, %c0_i32_0 : i32, i32
  }
  func.func @transform_2(%arg0: i32) -> (i32, i32) {
    %c0_i32 = arith.constant 0 : i32
    %c0_i32_0 = arith.constant 0 : i32
    %c0_i32_1 = arith.constant 0 : i32
    return %c0_i32, %c0_i32_0 : i32, i32
  }
  func.func @transform_3(%arg0: i32) -> (i32, i32) {
    %c0_i32 = arith.constant 0 : i32
    %c0_i32_0 = arith.constant 0 : i32
    return %c0_i32, %arg0 : i32, i32
  }
}

</mosaic_0001>

<llo_original>
// kernel: mlp_forward.3
$region0: #{mlp_forward.3}
  #allocation0 [shape = 'u32[]', space=smem, size = 0x4, offset = 0x4, fixed_abs, tag = 'smem constant byte address 0x4 - core index']
  #allocation1 [shape = 'u32[144,128]{1,0:T(1,128)}', space=vmem, size = 0x12000, scoped, tag = 'internal scratch']
  %s0 = inlined_call_operand.vmem [shape: f32[1,512], index: 0, kind: input, shape index: {}]
  %s1 = inlined_call_operand.vmem [shape: f32[128,5], index: 1, kind: input, shape index: {}]
  %s2 = inlined_call_operand.vmem [shape: bf16[128,128], index: 2, kind: input, shape index: {}]
  %s3 = inlined_call_operand.vmem [shape: f32[1,512], index: 3, kind: output, shape index: {}]
  %s4 = sld [smem:[#allocation0]]
  $region45: #{mlp_forward.3} parent=0
    _
  %s6 = ssub.s32 1, %s4
  %s7 = scalar_select 0, %s6, %s4
  loop: start=0, step=1, limit=6
  $region2: #{mlp_forward.3} parent=0 // loop_pre_header
    _
  $region3: #{mlp_forward.3} parent=0 // loop_header
    %s9 = sphi 0, %s13
    %p10 = scmp.ge.s32.totalorder %s9, 6
    %s19 = sphi 0, %s21
    %s22 = sphi 0, %s19
    %s23 = sphi 0, %s22
    %s39 = sphi 0, %s23
    %s43 = sphi 0, %s43
    %s45 = sphi 0, %s43
    %s46 = sphi 0, %s45
    %s60 = sphi 0, %s46
    %s64 = sphi 0, %s64
    %s66 = sphi 0, %s64
    %s67 = sphi 0, %s66
    %s81 = sphi 0, %s67
    %s87 = sphi 0, %s89
    %s90 = sphi 0, %s87
    %s91 = sphi 0, %s90
    %s107 = sphi 0, %s91
  $region4: #{mlp_forward.3} parent=0 // loop_header_branch
    %12 = sbr.rel (%p10) target = $region8
  $region5: #{mlp_forward.3} parent=0 // loop_body
    %s14 = ssub.s32 %s9, 1
    %s15 = ssub.s32 %s9, 2
    %s16 = sadd.s32 %s9, 1
    %s17 = ssub.s32 %s9, %s16
    %p18 = scmp.eq.s32.totalorder %s17, 0
    %s20 = sadd.s32 %s19, 1
    %s21 = scalar_select %p18, %s19, %s20
    %p24 = pneg %p18
    %p25 = scmp.eq.s32.totalorder %s9, 3
    %p26 = por %p24, %p25
    %p27 = scmp.ne.s32.totalorder %s19, %s22
    %p28 = scmp.eq.s32.totalorder %s9, 0
    %p29 = por %p27, %p28
    %p30 = scmp.ne.s32.totalorder %s19, %s22
    %p31 = scmp.eq.s32.totalorder %s14, 3
    %p32 = por %p30, %p31
    %p33 = scmp.ne.s32.totalorder %s22, %s23
    %p34 = scmp.eq.s32.totalorder %s14, 0
    %p35 = por %p33, %p34
    %p36 = scmp.ne.s32.totalorder %s22, %s23
    %p37 = scmp.eq.s32.totalorder %s15, 3
    %p38 = por %p36, %p37
    %p40 = scmp.ne.s32.totalorder %s23, %s39
    %p41 = scmp.eq.s32.totalorder %s15, 0
    %p42 = por %p40, %p41
    %s44 = sadd.s32 %s43, 1
    %p47 = scmp.eq.s32.totalorder %s9, 3
    %p48 = scmp.ne.s32.totalorder %s43, %s45
    %p49 = scmp.eq.s32.totalorder %s9, 0
    %p50 = por %p48, %p49
    %p51 = scmp.ne.s32.totalorder %s43, %s45
    %p52 = scmp.eq.s32.totalorder %s14, 3
    %p53 = por %p51, %p52
    %p54 = scmp.ne.s32.totalorder %s45, %s46
    %p55 = scmp.eq.s32.totalorder %s14, 0
    %p56 = por %p54, %p55
    %p57 = scmp.ne.s32.totalorder %s45, %s46
    %p58 = scmp.eq.s32.totalorder %s15, 3
    %p59 = por %p57, %p58
    %p61 = scmp.ne.s32.totalorder %s46, %s60
    %p62 = scmp.eq.s32.totalorder %s15, 0
    %p63 = por %p61, %p62
    %s65 = sadd.s32 %s64, 1
    %p68 = scmp.eq.s32.totalorder %s9, 3
    %p69 = scmp.ne.s32.totalorder %s64, %s66
    %p70 = scmp.eq.s32.totalorder %s9, 0
    %p71 = por %p69, %p70
    %p72 = scmp.ne.s32.totalorder %s64, %s66
    %p73 = scmp.eq.s32.totalorder %s14, 3
    %p74 = por %p72, %p73
    %p75 = scmp.ne.s32.totalorder %s66, %s67
    %p76 = scmp.eq.s32.totalorder %s14, 0
    %p77 = por %p75, %p76
    %p78 = scmp.ne.s32.totalorder %s66, %s67
    %p79 = scmp.eq.s32.totalorder %s15, 3
    %p80 = por %p78, %p79
    %p82 = scmp.ne.s32.totalorder %s67, %s81
    %p83 = scmp.eq.s32.totalorder %s15, 0
    %p84 = por %p82, %p83
    %s85 = ssub.s32 %s9, %s16
    %p86 = scmp.eq.s32.totalorder %s85, 0
    %s88 = sadd.s32 %s87, 1
    %s89 = scalar_select %p86, %s87, %s88
    %p92 = pneg %p86
    %p93 = scmp.eq.s32.totalorder %s9, 3
    %p94 = por %p92, %p93
    %p95 = scmp.ne.s32.totalorder %s87, %s90
    %p96 = scmp.eq.s32.totalorder %s9, 0
    %p97 = por %p95, %p96
    %p98 = scmp.ne.s32.totalorder %s87, %s90
    %p99 = scmp.eq.s32.totalorder %s14, 3
    %p100 = por %p98, %p99
    %p101 = scmp.ne.s32.totalorder %s90, %s91
    %p102 = scmp.eq.s32.totalorder %s14, 0
    %p103 = por %p101, %p102
    %p104 = scmp.ne.s32.totalorder %s90, %s91
    %p105 = scmp.eq.s32.totalorder %s15, 3
    %p106 = por %p104, %p105
    %p108 = scmp.ne.s32.totalorder %s91, %s107
    %p109 = scmp.eq.s32.totalorder %s15, 0
    %p110 = por %p108, %p109
    %p111 = scmp.le.s32.totalorder 1, %s9
    %p112 = scmp.lt.s32.totalorder %s9, 5
    %p113 = pnand %p111, %p112
    %p114 = pneg %p113
    // Predicated region
    $region9: #{mlp_forward.3} parent=5 // pred_check
      _
    $region10: #{mlp_forward.3} parent=5 // pred_check_branch
      %116 = sbr.rel (%p113) target = $region12
    $region11: #{mlp_forward.3} parent=5 // pred_region
      %s117 = ssub.s32 %s9, 1
      // Predicated region
      $region13: #{mlp_forward.3} parent=11 // pred_check
        %p118 = pneg %p56
      $region14: #{mlp_forward.3} parent=11 // pred_check_branch
        %120 = sbr.rel (%p118) target = $region16
      $region15: #{mlp_forward.3} parent=11 // pred_region
        _
      $region16: #{mlp_forward.3} parent=11 // pred_fallthru
        _
      // Predicated region
      $region17: #{mlp_forward.3} parent=11 // pred_check
        %p121 = pneg %p77
      $region18: #{mlp_forward.3} parent=11 // pred_check_branch
        %123 = sbr.rel (%p121) target = $region20
      $region19: #{mlp_forward.3} parent=11 // pred_region
        _
      $region20: #{mlp_forward.3} parent=11 // pred_fallthru
        _
    $region12: #{mlp_forward.3} parent=5 // pred_fallthru
      _
    %p124 = scmp.lt.s32.totalorder %s9, 4
    // Predicated region
    $region21: #{mlp_forward.3} parent=5 // pred_check
      %p125 = pneg %p124
    $region22: #{mlp_forward.3} parent=5 // pred_check_branch
      %127 = sbr.rel (%p125) target = $region24
    $region23: #{mlp_forward.3} parent=5 // pred_region
      // Predicated region
      $region25: #{mlp_forward.3} parent=23 // pred_check
        %p128 = pneg %p29
      $region26: #{mlp_forward.3} parent=23 // pred_check_branch
        %130 = sbr.rel (%p128) target = $region28
      $region27: #{mlp_forward.3} parent=23 // pred_region
        %p131 = scmp.lt.s32.totalorder %s9, 3
        %s132 = scalar_select %p131, %s9, 3
        %s133 = scalar_lea.vmem %s0, %s132
      $region28: #{mlp_forward.3} parent=23 // pred_fallthru
        _
    $region24: #{mlp_forward.3} parent=5 // pred_fallthru
      _
    %p134 = scmp.le.s32.totalorder 1, %s9
    %p135 = scmp.lt.s32.totalorder %s9, 5
    %p136 = pnand %p134, %p135
    %p137 = pneg %p136
    // Predicated region
    $region29: #{mlp_forward.3} parent=5 // pred_check
      _
    $region30: #{mlp_forward.3} parent=5 // pred_check_branch
      %139 = sbr.rel (%p136) target = $region32
    $region31: #{mlp_forward.3} parent=5 // pred_region
      %s140 = ssub.s32 %s9, 1
      %p141 = scmp.lt.s32.totalorder %s14, 3
      %s142 = scalar_select %p141, %s14, 3
      %s143 = scalar_lea.vmem %s0, %s142
      %p144 = pneg %p35
      %p145 = pneg %p32
      %p146 = pneg %p56
      %p147 = pneg %p53
      %p148 = pneg %p77
      %p149 = pneg %p74
      %p150 = pneg %p103
      %p151 = pneg %p100
      %p152 = scmp.lt.s32.totalorder %s14, 3
      %s153 = scalar_select %p152, %s14, 3
      %s154 = scalar_lea.vmem %s3, %s153
      %p155 = scmp.lt.s32.totalorder %s14, 3
      %s156 = scalar_select %p155, %s14, 3
      %s157 = scalar_lea.vmem %s0, %s156
      %p158 = scmp.lt.s32.totalorder %s14, 3
      %s159 = scalar_select %p158, %s14, 3
      %s160 = scalar_lea.vmem %s3, %s159
      %v162 = vld [vmem:[%s157] sm:$0x1]
      %v163 = vld [vmem:[%s1] sm:$0xff]
      %v164 = vld [vmem:[%s1 + $0x8] sm:$0xff]
      %v165 = vld [vmem:[%s1 + $0x10] sm:$0xff]
      %v166 = vld [vmem:[%s1 + $0x18] sm:$0xff]
      %v167 = vld [vmem:[%s1 + $0x20] sm:$0xff]
      %v168 = vld [vmem:[%s1 + $0x28] sm:$0xff]
      %v169 = vld [vmem:[%s1 + $0x30] sm:$0xff]
      %v170 = vld [vmem:[%s1 + $0x38] sm:$0xff]
      %v171 = vld [vmem:[%s1 + $0x40] sm:$0xff]
      %v172 = vld [vmem:[%s1 + $0x48] sm:$0xff]
      %v173 = vld [vmem:[%s1 + $0x50] sm:$0xff]
      %v174 = vld [vmem:[%s1 + $0x58] sm:$0xff]
      %v175 = vld [vmem:[%s1 + $0x60] sm:$0xff]
      %v176 = vld [vmem:[%s1 + $0x68] sm:$0xff]
      %v177 = vld [vmem:[%s1 + $0x70] sm:$0xff]
      %v178 = vld [vmem:[%s1 + $0x78] sm:$0xff]
      %180 = vset.pattern.permute.xlu0 0
      %181 = vperm.xlu0 %180, %v163
      %v182 = vpop.permute.xlu0 %181
      %185 = vset.pattern.permute.xlu0 0
      %186 = vperm.xlu0 %185, %v164
      %v187 = vpop.permute.xlu0 %186
      %190 = vset.pattern.permute.xlu0 0
      %191 = vperm.xlu0 %190, %v165
      %v192 = vpop.permute.xlu0 %191
      %195 = vset.pattern.permute.xlu0 0
      %196 = vperm.xlu0 %195, %v166
      %v197 = vpop.permute.xlu0 %196
      %200 = vset.pattern.permute.xlu0 0
      %201 = vperm.xlu0 %200, %v167
      %v202 = vpop.permute.xlu0 %201
      %205 = vset.pattern.permute.xlu0 0
      %206 = vperm.xlu0 %205, %v168
      %v207 = vpop.permute.xlu0 %206
      %210 = vset.pattern.permute.xlu0 0
      %211 = vperm.xlu0 %210, %v169
      %v212 = vpop.permute.xlu0 %211
      %215 = vset.pattern.permute.xlu0 0
      %216 = vperm.xlu0 %215, %v170
      %v217 = vpop.permute.xlu0 %216
      %220 = vset.pattern.permute.xlu0 0
      %221 = vperm.xlu0 %220, %v171
      %v222 = vpop.permute.xlu0 %221
      %225 = vset.pattern.permute.xlu0 0
      %226 = vperm.xlu0 %225, %v172
      %v227 = vpop.permute.xlu0 %226
      %230 = vset.pattern.permute.xlu0 0
      %231 = vperm.xlu0 %230, %v173
      %v232 = vpop.permute.xlu0 %231
      %235 = vset.pattern.permute.xlu0 0
      %236 = vperm.xlu0 %235, %v174
      %v237 = vpop.permute.xlu0 %236
      %240 = vset.pattern.permute.xlu0 0
      %241 = vperm.xlu0 %240, %v175
      %v242 = vpop.permute.xlu0 %241
      %245 = vset.pattern.permute.xlu0 0
      %246 = vperm.xlu0 %245, %v176
      %v247 = vpop.permute.xlu0 %246
      %250 = vset.pattern.permute.xlu0 0
      %251 = vperm.xlu0 %250, %v177
      %v252 = vpop.permute.xlu0 %251
      %255 = vset.pattern.permute.xlu0 0
      %256 = vperm.xlu0 %255, %v178
      %v257 = vpop.permute.xlu0 %256
      %v260 = vlaneseq
      %v261 = vshrl.u32 %v260, 7
      %v262 = vsub.s32 0, %v261
      %v263 = vrot.slane %v162, %v262
      %v265 = vmul.f32 %v182, %v263
      %v266 = vmul.f32 %v187, %v263
      %v267 = vmul.f32 %v192, %v263
      %v268 = vmul.f32 %v197, %v263
      %v269 = vmul.f32 %v202, %v263
      %v270 = vmul.f32 %v207, %v263
      %v271 = vmul.f32 %v212, %v263
      %v272 = vmul.f32 %v217, %v263
      %v273 = vmul.f32 %v222, %v263
      %v274 = vmul.f32 %v227, %v263
      %v275 = vmul.f32 %v232, %v263
      %v276 = vmul.f32 %v237, %v263
      %v277 = vmul.f32 %v242, %v263
      %v278 = vmul.f32 %v247, %v263
      %v279 = vmul.f32 %v252, %v263
      %v280 = vmul.f32 %v257, %v263
      %281 = vset.pattern.permute.xlu0 1
      %282 = vperm.xlu0 %281, %v163
      %v283 = vpop.permute.xlu0 %282
      %285 = vset.pattern.permute.xlu0 1
      %286 = vperm.xlu0 %285, %v164
      %v287 = vpop.permute.xlu0 %286
      %289 = vset.pattern.permute.xlu0 1
      %290 = vperm.xlu0 %289, %v165
      %v291 = vpop.permute.xlu0 %290
      %293 = vset.pattern.permute.xlu0 1
      %294 = vperm.xlu0 %293, %v166
      %v295 = vpop.permute.xlu0 %294
      %297 = vset.pattern.permute.xlu0 1
      %298 = vperm.xlu0 %297, %v167
      %v299 = vpop.permute.xlu0 %298
      %301 = vset.pattern.permute.xlu0 1
      %302 = vperm.xlu0 %301, %v168
      %v303 = vpop.permute.xlu0 %302
      %305 = vset.pattern.permute.xlu0 1
      %306 = vperm.xlu0 %305, %v169
      %v307 = vpop.permute.xlu0 %306
      %309 = vset.pattern.permute.xlu0 1
      %310 = vperm.xlu0 %309, %v170
      %v311 = vpop.permute.xlu0 %310
      %313 = vset.pattern.permute.xlu0 1
      %314 = vperm.xlu0 %313, %v171
      %v315 = vpop.permute.xlu0 %314
      %317 = vset.pattern.permute.xlu0 1
      %318 = vperm.xlu0 %317, %v172
      %v319 = vpop.permute.xlu0 %318
      %321 = vset.pattern.permute.xlu0 1
      %322 = vperm.xlu0 %321, %v173
      %v323 = vpop.permute.xlu0 %322
      %325 = vset.pattern.permute.xlu0 1
      %326 = vperm.xlu0 %325, %v174
      %v327 = vpop.permute.xlu0 %326
      %329 = vset.pattern.permute.xlu0 1
      %330 = vperm.xlu0 %329, %v175
      %v331 = vpop.permute.xlu0 %330
      %333 = vset.pattern.permute.xlu0 1
      %334 = vperm.xlu0 %333, %v176
      %v335 = vpop.permute.xlu0 %334
      %337 = vset.pattern.permute.xlu0 1
      %338 = vperm.xlu0 %337, %v177
      %v339 = vpop.permute.xlu0 %338
      %341 = vset.pattern.permute.xlu0 1
      %342 = vperm.xlu0 %341, %v178
      %v343 = vpop.permute.xlu0 %342
      %v345 = vadd.f32 %v265, %v283
      %v346 = vadd.f32 %v266, %v287
      %v347 = vadd.f32 %v267, %v291
      %v348 = vadd.f32 %v268, %v295
      %v349 = vadd.f32 %v269, %v299
      %v350 = vadd.f32 %v270, %v303
      %v351 = vadd.f32 %v271, %v307
      %v352 = vadd.f32 %v272, %v311
      %v353 = vadd.f32 %v273, %v315
      %v354 = vadd.f32 %v274, %v319
      %v355 = vadd.f32 %v275, %v323
      %v356 = vadd.f32 %v276, %v327
      %v357 = vadd.f32 %v277, %v331
      %v358 = vadd.f32 %v278, %v335
      %v359 = vadd.f32 %v279, %v339
      %v360 = vadd.f32 %v280, %v343
      %v361 = vmax.f32 %v345, 0.0
      %v362 = vmax.f32 %v346, 0.0
      %v363 = vmax.f32 %v347, 0.0
      %v364 = vmax.f32 %v348, 0.0
      %v365 = vmax.f32 %v349, 0.0
      %v366 = vmax.f32 %v350, 0.0
      %v367 = vmax.f32 %v351, 0.0
      %v368 = vmax.f32 %v352, 0.0
      %v369 = vmax.f32 %v353, 0.0
      %v370 = vmax.f32 %v354, 0.0
      %v371 = vmax.f32 %v355, 0.0
      %v372 = vmax.f32 %v356, 0.0
      %v373 = vmax.f32 %v357, 0.0
      %v374 = vmax.f32 %v358, 0.0
      %v375 = vmax.f32 %v359, 0.0
      %v376 = vmax.f32 %v360, 0.0
      %v377 = vld [vmem:[%s2] sm:$0xf]
      %v378 = vld [vmem:[%s2 + $0x4] sm:$0xf]
      %v379 = vld [vmem:[%s2 + $0x8] sm:$0xf]
      %v380 = vld [vmem:[%s2 + $0xc] sm:$0xf]
      %v381 = vld [vmem:[%s2 + $0x10] sm:$0xf]
      %v382 = vld [vmem:[%s2 + $0x14] sm:$0xf]
      %v383 = vld [vmem:[%s2 + $0x18] sm:$0xf]
      %v384 = vld [vmem:[%s2 + $0x1c] sm:$0xf]
      %v385 = vld [vmem:[%s2 + $0x20] sm:$0xf]
      %v386 = vld [vmem:[%s2 + $0x24] sm:$0xf]
      %v387 = vld [vmem:[%s2 + $0x28] sm:$0xf]
      %v388 = vld [vmem:[%s2 + $0x2c] sm:$0xf]
      %v389 = vld [vmem:[%s2 + $0x30] sm:$0xf]
      %v390 = vld [vmem:[%s2 + $0x34] sm:$0xf]
      %v391 = vld [vmem:[%s2 + $0x38] sm:$0xf]
      %v392 = vld [vmem:[%s2 + $0x3c] sm:$0xf]
      %v393 = vpack.c.bf16 %v362, %v361
      %v394 = vpack.c.bf16 %v364, %v363
      %v395 = vpack.c.bf16 %v366, %v365
      %v396 = vpack.c.bf16 %v368, %v367
      %v397 = vpack.c.bf16 %v370, %v369
      %v398 = vpack.c.bf16 %v372, %v371
      %v399 = vpack.c.bf16 %v374, %v373
      %v400 = vpack.c.bf16 %v376, %v375
      %401 = vset.pattern.permute.xlu0 2
      %402 = vperm.xlu0 %401, %v163
      %v403 = vpop.permute.xlu0 %402
      %405 = vset.pattern.permute.xlu0 2
      %406 = vperm.xlu0 %405, %v164
      %v407 = vpop.permute.xlu0 %406
      %409 = vset.pattern.permute.xlu0 2
      %410 = vperm.xlu0 %409, %v165
      %v411 = vpop.permute.xlu0 %410
      %413 = vset.pattern.permute.xlu0 2
      %414 = vperm.xlu0 %413, %v166
      %v415 = vpop.permute.xlu0 %414
      %417 = vset.pattern.permute.xlu0 2
      %418 = vperm.xlu0 %417, %v167
      %v419 = vpop.permute.xlu0 %418
      %421 = vset.pattern.permute.xlu0 2
      %422 = vperm.xlu0 %421, %v168
      %v423 = vpop.permute.xlu0 %422
      %425 = vset.pattern.permute.xlu0 2
      %426 = vperm.xlu0 %425, %v169
      %v427 = vpop.permute.xlu0 %426
      %429 = vset.pattern.permute.xlu0 2
      %430 = vperm.xlu0 %429, %v170
      %v431 = vpop.permute.xlu0 %430
      %433 = vset.pattern.permute.xlu0 2
      %434 = vperm.xlu0 %433, %v171
      %v435 = vpop.permute.xlu0 %434
      %437 = vset.pattern.permute.xlu0 2
      %438 = vperm.xlu0 %437, %v172
      %v439 = vpop.permute.xlu0 %438
      %441 = vset.pattern.permute.xlu0 2
      %442 = vperm.xlu0 %441, %v173
      %v443 = vpop.permute.xlu0 %442
      %445 = vset.pattern.permute.xlu0 2
      %446 = vperm.xlu0 %445, %v174
      %v447 = vpop.permute.xlu0 %446
      %449 = vset.pattern.permute.xlu0 2
      %450 = vperm.xlu0 %449, %v175
      %v451 = vpop.permute.xlu0 %450
      %453 = vset.pattern.permute.xlu0 2
      %454 = vperm.xlu0 %453, %v176
      %v455 = vpop.permute.xlu0 %454
      %457 = vset.pattern.permute.xlu0 2
      %458 = vperm.xlu0 %457, %v177
      %v459 = vpop.permute.xlu0 %458
      %461 = vset.pattern.permute.xlu0 2
      %462 = vperm.xlu0 %461, %v178
      %v463 = vpop.permute.xlu0 %462
      %v481 = vunpack.c.l.b16 %v377
      %v482 = vunpack.c.l.b16 %v378
      %v483 = vunpack.c.l.b16 %v379
      %v484 = vunpack.c.l.b16 %v380
      %v485 = vunpack.c.l.b16 %v381
      %v486 = vunpack.c.l.b16 %v382
      %v487 = vunpack.c.l.b16 %v383
      %v488 = vunpack.c.l.b16 %v384
      %v489 = vunpack.c.l.b16 %v385
      %v490 = vunpack.c.l.b16 %v386
      %v491 = vunpack.c.l.b16 %v387
      %v492 = vunpack.c.l.b16 %v388
      %v493 = vunpack.c.l.b16 %v389
      %v494 = vunpack.c.l.b16 %v390
      %v495 = vunpack.c.l.b16 %v391
      %v496 = vunpack.c.l.b16 %v392
      %v497 = vpack.c.b16 %v482, %v481
      %v498 = vpack.c.b16 %v484, %v483
      %v499 = vpack.c.b16 %v486, %v485
      %v500 = vpack.c.b16 %v488, %v487
      %v501 = vpack.c.b16 %v490, %v489
      %v502 = vpack.c.b16 %v492, %v491
      %v503 = vpack.c.b16 %v494, %v493
      %v504 = vpack.c.b16 %v496, %v495
      %513 = vmatprep.subr.bf16.mxu0 0
      %514 = vmatpush1.bf16.msra.mxu0 %v400
      %515 = vmatprep.subr.bf16.mxu0 0
      %516 = vmatpush1.bf16.msra.mxu0 %v399
      %517 = vmatprep.subr.bf16.mxu0 0
      %518 = vmatpush1.bf16.msra.mxu0 %v398
      %519 = vmatprep.subr.bf16.mxu0 0
      %520 = vmatpush1.bf16.msra.mxu0 %v397
      %521 = vmatprep.subr.bf16.mxu0 0
      %522 = vmatpush1.bf16.msra.mxu0 %v396
      %523 = vmatprep.subr.bf16.mxu0 0
      %524 = vmatpush1.bf16.msra.mxu0 %v395
      %525 = vmatprep.subr.bf16.mxu0 0
      %526 = vmatpush1.bf16.msra.mxu0 %v394
      %527 = vmatprep.subr.bf16.mxu0 0
      %528 = vmatpush1.bf16.msra.mxu0 %v393
      %529 = vmatprep.subr.bf16.mxu0 0
      %530 = vmatpush2.bf16.msra.mxu0 0
      %531 = vmatprep.subr.bf16.mxu0 0
      %532 = vmatpush2.bf16.msra.mxu0 0
      %533 = vmatprep.subr.bf16.mxu0 0
      %534 = vmatpush2.bf16.msra.mxu0 0
      %535 = vmatprep.subr.bf16.mxu0 0
      %536 = vmatpush2.bf16.msra.mxu0 0
      %537 = vmatprep.subr.bf16.mxu0 0
      %538 = vmatpush2.bf16.msra.mxu0 0
      %539 = vmatprep.subr.bf16.mxu0 0
      %540 = vmatpush2.bf16.msra.mxu0 0
      %541 = vmatprep.subr.bf16.mxu0 0
      %542 = vmatpush2.bf16.msra.mxu0 0
      %543 = vmatprep.subr.bf16.mxu0 0
      %544 = vmatpush2.bf16.msra.mxu0 0
      %545 = vmatprep.mubr.bf16.mxu0 0
      %546 = vmatmul.mubr.bf16.gmra.mxu0 %v497
      %v547 = vpop.f32.mrf.mxu0
      %v548 = vadd.f32 %v403, %v547
      %v549 = vpop.f32.mrf.mxu0
      %v550 = vpop.f32.mrf.mxu0
      %v551 = vadd.f32 %v407, %v550
      %v552 = vpop.f32.mrf.mxu0
      %553 = vmatprep.mubr.bf16.mxu0 0
      %554 = vmatmul.mubr.bf16.gmra.mxu0 %v498
      %v555 = vpop.f32.mrf.mxu0
      %v556 = vadd.f32 %v411, %v555
      %v557 = vpop.f32.mrf.mxu0
      %v558 = vpop.f32.mrf.mxu0
      %v559 = vadd.f32 %v415, %v558
      %v560 = vpop.f32.mrf.mxu0
      %561 = vmatprep.mubr.bf16.mxu0 0
      %562 = vmatmul.mubr.bf16.gmra.mxu0 %v499
      %v563 = vpop.f32.mrf.mxu0
      %v564 = vadd.f32 %v419, %v563
      %v565 = vpop.f32.mrf.mxu0
      %v566 = vpop.f32.mrf.mxu0
      %v567 = vadd.f32 %v423, %v566
      %v568 = vpop.f32.mrf.mxu0
      %569 = vmatprep.mubr.bf16.mxu0 0
      %570 = vmatmul.mubr.bf16.gmra.mxu0 %v500
      %v571 = vpop.f32.mrf.mxu0
      %v572 = vadd.f32 %v427, %v571
      %v573 = vpop.f32.mrf.mxu0
      %v574 = vpop.f32.mrf.mxu0
      %v575 = vadd.f32 %v431, %v574
      %v576 = vpop.f32.mrf.mxu0
      %577 = vmatprep.mubr.bf16.mxu0 0
      %578 = vmatmul.mubr.bf16.gmra.mxu0 %v501
      %v579 = vpop.f32.mrf.mxu0
      %v580 = vadd.f32 %v435, %v579
      %v581 = vpop.f32.mrf.mxu0
      %v582 = vpop.f32.mrf.mxu0
      %v583 = vadd.f32 %v439, %v582
      %v584 = vpop.f32.mrf.mxu0
      %585 = vmatprep.mubr.bf16.mxu0 0
      %586 = vmatmul.mubr.bf16.gmra.mxu0 %v502
      %v587 = vpop.f32.mrf.mxu0
      %v588 = vadd.f32 %v443, %v587
      %v589 = vpop.f32.mrf.mxu0
      %v590 = vpop.f32.mrf.mxu0
      %v591 = vadd.f32 %v447, %v590
      %v592 = vpop.f32.mrf.mxu0
      %593 = vmatprep.mubr.bf16.mxu0 0
      %594 = vmatmul.mubr.bf16.gmra.mxu0 %v503
      %v595 = vpop.f32.mrf.mxu0
      %v596 = vadd.f32 %v451, %v595
      %v597 = vpop.f32.mrf.mxu0
      %v598 = vpop.f32.mrf.mxu0
      %v599 = vadd.f32 %v455, %v598
      %v600 = vpop.f32.mrf.mxu0
      %601 = vmatprep.mubr.bf16.mxu0 0
      %602 = vmatmul.mubr.bf16.gmra.mxu0 %v504
      %v603 = vpop.f32.mrf.mxu0
      %v604 = vadd.f32 %v459, %v603
      %v605 = vpop.f32.mrf.mxu0
      %v606 = vpop.f32.mrf.mxu0
      %v607 = vadd.f32 %v463, %v606
      %v608 = vpop.f32.mrf.mxu0
      %609 = vdwg.mxu0
      %v610 = vmax.f32 %v548, 0.0
      %v611 = vmax.f32 %v551, 0.0
      %v612 = vmax.f32 %v556, 0.0
      %v613 = vmax.f32 %v559, 0.0
      %v614 = vmax.f32 %v564, 0.0
      %v615 = vmax.f32 %v567, 0.0
      %v616 = vmax.f32 %v572, 0.0
      %v617 = vmax.f32 %v575, 0.0
      %v618 = vmax.f32 %v580, 0.0
      %v619 = vmax.f32 %v583, 0.0
      %v620 = vmax.f32 %v588, 0.0
      %v621 = vmax.f32 %v591, 0.0
      %v622 = vmax.f32 %v596, 0.0
      %v623 = vmax.f32 %v599, 0.0
      %v624 = vmax.f32 %v604, 0.0
      %v625 = vmax.f32 %v607, 0.0
      %626 = vset.pattern.permute.xlu0 3
      %627 = vperm.xlu0 %626, %v163
      %v628 = vpop.permute.xlu0 %627
      %630 = vset.pattern.permute.xlu0 3
      %631 = vperm.xlu0 %630, %v164
      %v632 = vpop.permute.xlu0 %631
      %634 = vset.pattern.permute.xlu0 3
      %635 = vperm.xlu0 %634, %v165
      %v636 = vpop.permute.xlu0 %635
      %638 = vset.pattern.permute.xlu0 3
      %639 = vperm.xlu0 %638, %v166
      %v640 = vpop.permute.xlu0 %639
      %642 = vset.pattern.permute.xlu0 3
      %643 = vperm.xlu0 %642, %v167
      %v644 = vpop.permute.xlu0 %643
      %646 = vset.pattern.permute.xlu0 3
      %647 = vperm.xlu0 %646, %v168
      %v648 = vpop.permute.xlu0 %647
      %650 = vset.pattern.permute.xlu0 3
      %651 = vperm.xlu0 %650, %v169
      %v652 = vpop.permute.xlu0 %651
      %654 = vset.pattern.permute.xlu0 3
      %655 = vperm.xlu0 %654, %v170
      %v656 = vpop.permute.xlu0 %655
      %658 = vset.pattern.permute.xlu0 3
      %659 = vperm.xlu0 %658, %v171
      %v660 = vpop.permute.xlu0 %659
      %662 = vset.pattern.permute.xlu0 3
      %663 = vperm.xlu0 %662, %v172
      %v664 = vpop.permute.xlu0 %663
      %666 = vset.pattern.permute.xlu0 3
      %667 = vperm.xlu0 %666, %v173
      %v668 = vpop.permute.xlu0 %667
      %670 = vset.pattern.permute.xlu0 3
      %671 = vperm.xlu0 %670, %v174
      %v672 = vpop.permute.xlu0 %671
      %674 = vset.pattern.permute.xlu0 3
      %675 = vperm.xlu0 %674, %v175
      %v676 = vpop.permute.xlu0 %675
      %678 = vset.pattern.permute.xlu0 3
      %679 = vperm.xlu0 %678, %v176
      %v680 = vpop.permute.xlu0 %679
      %682 = vset.pattern.permute.xlu0 3
      %683 = vperm.xlu0 %682, %v177
      %v684 = vpop.permute.xlu0 %683
      %686 = vset.pattern.permute.xlu0 3
      %687 = vperm.xlu0 %686, %v178
      %v688 = vpop.permute.xlu0 %687
      %v690 = vmul.f32 %v610, %v628
      %v691 = vmul.f32 %v611, %v632
      %v692 = vmul.f32 %v612, %v636
      %v693 = vmul.f32 %v613, %v640
      %v694 = vmul.f32 %v614, %v644
      %v695 = vmul.f32 %v615, %v648
      %v696 = vmul.f32 %v616, %v652
      %v697 = vmul.f32 %v617, %v656
      %v698 = vmul.f32 %v618, %v660
      %v699 = vmul.f32 %v619, %v664
      %v700 = vmul.f32 %v620, %v668
      %v701 = vmul.f32 %v621, %v672
      %v702 = vmul.f32 %v622, %v676
      %v703 = vmul.f32 %v623, %v680
      %v704 = vmul.f32 %v624, %v684
      %v705 = vmul.f32 %v625, %v688
      %v706 = vadd.f32 %v690, %v691
      %v707 = vadd.f32 %v706, %v692
      %v708 = vadd.f32 %v707, %v693
      %v709 = vadd.f32 %v708, %v694
      %v710 = vadd.f32 %v709, %v695
      %v711 = vadd.f32 %v710, %v696
      %v712 = vadd.f32 %v711, %v697
      %v713 = vadd.f32 %v712, %v698
      %v714 = vadd.f32 %v713, %v699
      %v715 = vadd.f32 %v714, %v700
      %v716 = vadd.f32 %v715, %v701
      %v717 = vadd.f32 %v716, %v702
      %v718 = vadd.f32 %v717, %v703
      %v719 = vadd.f32 %v718, %v704
      %v720 = vadd.f32 %v719, %v705
      %v721 = vrot.slane %v720, 4
      %v722 = vadd.f32 %v720, %v721
      %v723 = vrot.slane %v722, 2
      %v724 = vadd.f32 %v722, %v723
      %v725 = vrot.slane %v724, 1
      %v726 = vadd.f32 %v724, %v725
      %727 = vset.pattern.permute.xlu0 4
      %728 = vperm.xlu0 %727, %v163
      %v729 = vpop.permute.xlu0 %728
      %v731 = vadd.f32 %v726, %v729
      %732 = vst [vmem:[%s160] sm:$0x1] %v731
      %p733 = scmp.lt.s32.totalorder %s14, 3
      %s734 = scalar_select %p733, %s14, 3
      %s735 = scalar_lea.vmem %s3, %s734
      // Predicated region
      $region33: #{mlp_forward.3} parent=31 // pred_check
        %p736 = pneg %p100
      $region34: #{mlp_forward.3} parent=31 // pred_check_branch
        %738 = sbr.rel (%p736) target = $region36
      $region35: #{mlp_forward.3} parent=31 // pred_region
        _
      $region36: #{mlp_forward.3} parent=31 // pred_fallthru
        _
    $region32: #{mlp_forward.3} parent=5 // pred_fallthru
      _
    %p739 = scmp.le.s32.totalorder 2, %s9
    // Predicated region
    $region37: #{mlp_forward.3} parent=5 // pred_check
      %p740 = pneg %p739
    $region38: #{mlp_forward.3} parent=5 // pred_check_branch
      %742 = sbr.rel (%p740) target = $region40
    $region39: #{mlp_forward.3} parent=5 // pred_region
      %s743 = ssub.s32 %s9, 2
      // Predicated region
      $region41: #{mlp_forward.3} parent=39 // pred_check
        %p744 = pneg %p106
      $region42: #{mlp_forward.3} parent=39 // pred_check_branch
        %746 = sbr.rel (%p744) target = $region44
      $region43: #{mlp_forward.3} parent=39 // pred_region
        %p747 = scmp.lt.s32.totalorder %s15, 3
        %s748 = scalar_select %p747, %s15, 3
        %s749 = scalar_lea.vmem %s3, %s748
      $region44: #{mlp_forward.3} parent=39 // pred_fallthru
        _
    $region40: #{mlp_forward.3} parent=5 // pred_fallthru
      _
  $region6: #{mlp_forward.3} parent=0 // loop_footer
    %s13 = sadd.s32 1, %s9
  $region7: #{mlp_forward.3} parent=0 // loop_footer_branch
    %8 = sbr.rel target = $region3
  $region8: #{mlp_forward.3} parent=0 // loop_exit
    _

// kernel: mlp_forward.2
$region0: #{mlp_forward.2}
  #allocation0 [shape = 'u32[]', space=smem, size = 0x4, offset = 0x4, fixed_abs, tag = 'smem constant byte address 0x4 - core index']
  #allocation1 [shape = 'u32[144,128]{1,0:T(1,128)}', space=vmem, size = 0x12000, scoped, tag = 'internal scratch']
  %s0 = inlined_call_operand.vmem [shape: f32[1,512], index: 0, kind: input, shape index: {}]
  %s1 = inlined_call_operand.vmem [shape: f32[128,2], index: 1, kind: input, shape index: {}]
  %s2 = inlined_call_operand.vmem [shape: bf16[128,128], index: 2, kind: input, shape index: {}]
  %s3 = inlined_call_operand.vmem [shape: f32[2,128,1], index: 3, kind: output, shape index: {0}]
  %s4 = inlined_call_operand.vmem [shape: f32[2,128,1], index: 4, kind: output, shape index: {1}]
  %5 = xla_tuple %s3, %s4
  %s6 = sld [smem:[#allocation0]]
  $region57: #{mlp_forward.2} parent=0
    _
  %s8 = ssub.s32 1, %s6
  %s9 = scalar_select 0, %s8, %s6
  loop: start=0, step=1, limit=6
  $region2: #{mlp_forward.2} parent=0 // loop_pre_header
    _
  $region3: #{mlp_forward.2} parent=0 // loop_header
    %s11 = sphi 0, %s15
    %p12 = scmp.ge.s32.totalorder %s11, 6
    %s18 = sphi 0, %s30
    %s19 = sphi 0, %s26
    %s20 = sphi 0, %s18
    %s21 = sphi 0, %s19
    %s22 = sphi 0, %s20
    %s23 = sphi 0, %s21
    %s37 = sphi 0, %s39
    %s40 = sphi 0, %s37
    %s41 = sphi 0, %s40
    %s57 = sphi 0, %s41
    %s61 = sphi 0, %s61
    %s63 = sphi 0, %s61
    %s64 = sphi 0, %s63
    %s78 = sphi 0, %s64
    %s82 = sphi 0, %s82
    %s84 = sphi 0, %s82
    %s85 = sphi 0, %s84
    %s99 = sphi 0, %s85
    %s105 = sphi 0, %s107
    %s108 = sphi 0, %s105
    %s109 = sphi 0, %s108
    %s125 = sphi 0, %s109
    %s131 = sphi 0, %s133
    %s134 = sphi 0, %s131
    %s135 = sphi 0, %s134
    %s151 = sphi 0, %s135
  $region4: #{mlp_forward.2} parent=0 // loop_header_branch
    %14 = sbr.rel (%p12) target = $region8
  $region5: #{mlp_forward.2} parent=0 // loop_body
    %s16 = ssub.s32 %s11, 1
    %s17 = ssub.s32 %s11, 2
    %s24 = sadd.s32 1, %s19
    %p25 = scmp.ge.s32.totalorder %s24, 2
    %s26 = scalar_select %p25, 0, %s24
    %s27 = sadd.s32 1, %s18
    %s28 = scalar_select %p25, %s27, %s18
    %p29 = scmp.ge.s32.totalorder %s28, 2
    %s30 = scalar_select %p29, 0, %s28
    %s31 = smul.u32 %s18, 2
    %s32 = sadd.s32 %s31, %s19
    %s33 = smul.u32 %s30, 2
    %s34 = sadd.s32 %s33, %s26
    %s35 = ssub.s32 %s32, %s34
    %p36 = scmp.eq.s32.totalorder %s35, 0
    %s38 = sadd.s32 %s37, 1
    %s39 = scalar_select %p36, %s37, %s38
    %p42 = pneg %p36
    %p43 = scmp.eq.s32.totalorder %s11, 3
    %p44 = por %p42, %p43
    %p45 = scmp.ne.s32.totalorder %s37, %s40
    %p46 = scmp.eq.s32.totalorder %s11, 0
    %p47 = por %p45, %p46
    %p48 = scmp.ne.s32.totalorder %s37, %s40
    %p49 = scmp.eq.s32.totalorder %s16, 3
    %p50 = por %p48, %p49
    %p51 = scmp.ne.s32.totalorder %s40, %s41
    %p52 = scmp.eq.s32.totalorder %s16, 0
    %p53 = por %p51, %p52
    %p54 = scmp.ne.s32.totalorder %s40, %s41
    %p55 = scmp.eq.s32.totalorder %s17, 3
    %p56 = por %p54, %p55
    %p58 = scmp.ne.s32.totalorder %s41, %s57
    %p59 = scmp.eq.s32.totalorder %s17, 0
    %p60 = por %p58, %p59
    %s62 = sadd.s32 %s61, 1
    %p65 = scmp.eq.s32.totalorder %s11, 3
    %p66 = scmp.ne.s32.totalorder %s61, %s63
    %p67 = scmp.eq.s32.totalorder %s11, 0
    %p68 = por %p66, %p67
    %p69 = scmp.ne.s32.totalorder %s61, %s63
    %p70 = scmp.eq.s32.totalorder %s16, 3
    %p71 = por %p69, %p70
    %p72 = scmp.ne.s32.totalorder %s63, %s64
    %p73 = scmp.eq.s32.totalorder %s16, 0
    %p74 = por %p72, %p73
    %p75 = scmp.ne.s32.totalorder %s63, %s64
    %p76 = scmp.eq.s32.totalorder %s17, 3
    %p77 = por %p75, %p76
    %p79 = scmp.ne.s32.totalorder %s64, %s78
    %p80 = scmp.eq.s32.totalorder %s17, 0
    %p81 = por %p79, %p80
    %s83 = sadd.s32 %s82, 1
    %p86 = scmp.eq.s32.totalorder %s11, 3
    %p87 = scmp.ne.s32.totalorder %s82, %s84
    %p88 = scmp.eq.s32.totalorder %s11, 0
    %p89 = por %p87, %p88
    %p90 = scmp.ne.s32.totalorder %s82, %s84
    %p91 = scmp.eq.s32.totalorder %s16, 3
    %p92 = por %p90, %p91
    %p93 = scmp.ne.s32.totalorder %s84, %s85
    %p94 = scmp.eq.s32.totalorder %s16, 0
    %p95 = por %p93, %p94
    %p96 = scmp.ne.s32.totalorder %s84, %s85
    %p97 = scmp.eq.s32.totalorder %s17, 3
    %p98 = por %p96, %p97
    %p100 = scmp.ne.s32.totalorder %s85, %s99
    %p101 = scmp.eq.s32.totalorder %s17, 0
    %p102 = por %p100, %p101
    %s103 = ssub.s32 %s18, %s30
    %p104 = scmp.eq.s32.totalorder %s103, 0
    %s106 = sadd.s32 %s105, 1
    %s107 = scalar_select %p104, %s105, %s106
    %p110 = pneg %p104
    %p111 = scmp.eq.s32.totalorder %s11, 3
    %p112 = por %p110, %p111
    %p113 = scmp.ne.s32.totalorder %s105, %s108
    %p114 = scmp.eq.s32.totalorder %s11, 0
    %p115 = por %p113, %p114
    %p116 = scmp.ne.s32.totalorder %s105, %s108
    %p117 = scmp.eq.s32.totalorder %s16, 3
    %p118 = por %p116, %p117
    %p119 = scmp.ne.s32.totalorder %s108, %s109
    %p120 = scmp.eq.s32.totalorder %s16, 0
    %p121 = por %p119, %p120
    %p122 = scmp.ne.s32.totalorder %s108, %s109
    %p123 = scmp.eq.s32.totalorder %s17, 3
    %p124 = por %p122, %p123
    %p126 = scmp.ne.s32.totalorder %s109, %s125
    %p127 = scmp.eq.s32.totalorder %s17, 0
    %p128 = por %p126, %p127
    %s129 = ssub.s32 %s18, %s30
    %p130 = scmp.eq.s32.totalorder %s129, 0
    %s132 = sadd.s32 %s131, 1
    %s133 = scalar_select %p130, %s131, %s132
    %p136 = pneg %p130
    %p137 = scmp.eq.s32.totalorder %s11, 3
    %p138 = por %p136, %p137
    %p139 = scmp.ne.s32.totalorder %s131, %s134
    %p140 = scmp.eq.s32.totalorder %s11, 0
    %p141 = por %p139, %p140
    %p142 = scmp.ne.s32.totalorder %s131, %s134
    %p143 = scmp.eq.s32.totalorder %s16, 3
    %p144 = por %p142, %p143
    %p145 = scmp.ne.s32.totalorder %s134, %s135
    %p146 = scmp.eq.s32.totalorder %s16, 0
    %p147 = por %p145, %p146
    %p148 = scmp.ne.s32.totalorder %s134, %s135
    %p149 = scmp.eq.s32.totalorder %s17, 3
    %p150 = por %p148, %p149
    %p152 = scmp.ne.s32.totalorder %s135, %s151
    %p153 = scmp.eq.s32.totalorder %s17, 0
    %p154 = por %p152, %p153
    %p155 = scmp.le.s32.totalorder 1, %s11
    %p156 = scmp.lt.s32.totalorder %s11, 5
    %p157 = pnand %p155, %p156
    %p158 = pneg %p157
    // Predicated region
    $region9: #{mlp_forward.2} parent=5 // pred_check
      _
    $region10: #{mlp_forward.2} parent=5 // pred_check_branch
      %160 = sbr.rel (%p157) target = $region12
    $region11: #{mlp_forward.2} parent=5 // pred_region
      %s161 = ssub.s32 %s11, 1
      // Predicated region
      $region13: #{mlp_forward.2} parent=11 // pred_check
        %p162 = pneg %p74
      $region14: #{mlp_forward.2} parent=11 // pred_check_branch
        %164 = sbr.rel (%p162) target = $region16
      $region15: #{mlp_forward.2} parent=11 // pred_region
        _
      $region16: #{mlp_forward.2} parent=11 // pred_fallthru
        _
      // Predicated region
      $region17: #{mlp_forward.2} parent=11 // pred_check
        %p165 = pneg %p95
      $region18: #{mlp_forward.2} parent=11 // pred_check_branch
        %167 = sbr.rel (%p165) target = $region20
      $region19: #{mlp_forward.2} parent=11 // pred_region
        _
      $region20: #{mlp_forward.2} parent=11 // pred_fallthru
        _
    $region12: #{mlp_forward.2} parent=5 // pred_fallthru
      _
    %p168 = scmp.lt.s32.totalorder %s11, 4
    // Predicated region
    $region21: #{mlp_forward.2} parent=5 // pred_check
      %p169 = pneg %p168
    $region22: #{mlp_forward.2} parent=5 // pred_check_branch
      %171 = sbr.rel (%p169) target = $region24
    $region23: #{mlp_forward.2} parent=5 // pred_region
      // Predicated region
      $region25: #{mlp_forward.2} parent=23 // pred_check
        %p172 = pneg %p47
      $region26: #{mlp_forward.2} parent=23 // pred_check_branch
        %174 = sbr.rel (%p172) target = $region28
      $region27: #{mlp_forward.2} parent=23 // pred_region
        %s175 = smul.u32 %s18, 2
        %s176 = sadd.s32 %s175, %s19
        %p177 = scmp.lt.s32.totalorder %s176, 3
        %s178 = scalar_select %p177, %s176, 3
        %s179 = scalar_lea.vmem %s0, %s178
        %s180 = smul.u32 %s18, 2
        %s181 = sadd.s32 %s180, %s19
      $region28: #{mlp_forward.2} parent=23 // pred_fallthru
        _
    $region24: #{mlp_forward.2} parent=5 // pred_fallthru
      _
    %p182 = scmp.le.s32.totalorder 1, %s11
    %p183 = scmp.lt.s32.totalorder %s11, 5
    %p184 = pnand %p182, %p183
    %p185 = pneg %p184
    // Predicated region
    $region29: #{mlp_forward.2} parent=5 // pred_check
      _
    $region30: #{mlp_forward.2} parent=5 // pred_check_branch
      %187 = sbr.rel (%p184) target = $region32
    $region31: #{mlp_forward.2} parent=5 // pred_region
      %s188 = ssub.s32 %s11, 1
      %s189 = smul.u32 %s20, 2
      %s190 = sadd.s32 %s189, %s21
      %p191 = scmp.lt.s32.totalorder %s190, 3
      %s192 = scalar_select %p191, %s190, 3
      %s193 = scalar_lea.vmem %s0, %s192
      %p194 = pneg %p53
      %p195 = pneg %p50
      %p196 = pneg %p74
      %p197 = pneg %p71
      %p198 = pneg %p95
      %p199 = pneg %p92
      %p200 = pneg %p121
      %p201 = pneg %p118
      %p202 = scmp.lt.s32.totalorder %s20, 1
      %s203 = scalar_select %p202, %s20, 1
      %s204 = smul.addr %s203, 16
      %s205 = smul.addr %s204, 8
      %s206 = scalar_lea.vmem %s3, %s205
      %p207 = pneg %p147
      %p208 = pneg %p144
      %p209 = scmp.lt.s32.totalorder %s20, 1
      %s210 = scalar_select %p209, %s20, 1
      %s211 = smul.addr %s210, 16
      %s212 = smul.addr %s211, 8
      %s213 = scalar_lea.vmem %s4, %s212
      %s214 = smul.u32 %s20, 2
      %s215 = sadd.s32 %s214, %s21
      %p216 = scmp.lt.s32.totalorder %s215, 3
      %s217 = scalar_select %p216, %s215, 3
      %s218 = scalar_lea.vmem %s0, %s217
      %s219 = smul.u32 %s20, 2
      %s220 = sadd.s32 %s219, %s21
      %p221 = scmp.lt.s32.totalorder %s20, 1
      %s222 = scalar_select %p221, %s20, 1
      %s223 = smul.addr %s222, 16
      %s224 = smul.addr %s223, 8
      %s225 = scalar_lea.vmem %s3, %s224
      %p226 = scmp.lt.s32.totalorder %s20, 1
      %s227 = scalar_select %p226, %s20, 1
      %s228 = smul.addr %s227, 16
      %s229 = smul.addr %s228, 8
      %s230 = scalar_lea.vmem %s4, %s229
      %p232 = scmp.eq.s32.totalorder %s21, 0
      // Predicated region
      $region33: #{mlp_forward.2} parent=31 // pred_check
        %p233 = pneg %p232
      $region34: #{mlp_forward.2} parent=31 // pred_check_branch
        %235 = sbr.rel (%p233) target = $region36
      $region35: #{mlp_forward.2} parent=31 // pred_region
        %vm236 = vcmask 7168
        %237 = vst.msk [vmem:[%s225] sm:$0xff] %vm236, 0.0
        %238 = vst.msk [vmem:[%s225 + $0x8] sm:$0xff] %vm236, 0.0
        %239 = vst.msk [vmem:[%s225 + $0x10] sm:$0xff] %vm236, 0.0
        %240 = vst.msk [vmem:[%s225 + $0x18] sm:$0xff] %vm236, 0.0
        %241 = vst.msk [vmem:[%s225 + $0x20] sm:$0xff] %vm236, 0.0
        %242 = vst.msk [vmem:[%s225 + $0x28] sm:$0xff] %vm236, 0.0
        %243 = vst.msk [vmem:[%s225 + $0x30] sm:$0xff] %vm236, 0.0
        %244 = vst.msk [vmem:[%s225 + $0x38] sm:$0xff] %vm236, 0.0
        %245 = vst.msk [vmem:[%s225 + $0x40] sm:$0xff] %vm236, 0.0
        %246 = vst.msk [vmem:[%s225 + $0x48] sm:$0xff] %vm236, 0.0
        %247 = vst.msk [vmem:[%s225 + $0x50] sm:$0xff] %vm236, 0.0
        %248 = vst.msk [vmem:[%s225 + $0x58] sm:$0xff] %vm236, 0.0
        %249 = vst.msk [vmem:[%s225 + $0x60] sm:$0xff] %vm236, 0.0
        %250 = vst.msk [vmem:[%s225 + $0x68] sm:$0xff] %vm236, 0.0
        %251 = vst.msk [vmem:[%s225 + $0x70] sm:$0xff] %vm236, 0.0
        %252 = vst.msk [vmem:[%s225 + $0x78] sm:$0xff] %vm236, 0.0
        %253 = vst.msk [vmem:[%s230] sm:$0xff] %vm236, 0.0
        %254 = vst.msk [vmem:[%s230 + $0x8] sm:$0xff] %vm236, 0.0
        %255 = vst.msk [vmem:[%s230 + $0x10] sm:$0xff] %vm236, 0.0
        %256 = vst.msk [vmem:[%s230 + $0x18] sm:$0xff] %vm236, 0.0
        %257 = vst.msk [vmem:[%s230 + $0x20] sm:$0xff] %vm236, 0.0
        %258 = vst.msk [vmem:[%s230 + $0x28] sm:$0xff] %vm236, 0.0
        %259 = vst.msk [vmem:[%s230 + $0x30] sm:$0xff] %vm236, 0.0
        %260 = vst.msk [vmem:[%s230 + $0x38] sm:$0xff] %vm236, 0.0
        %261 = vst.msk [vmem:[%s230 + $0x40] sm:$0xff] %vm236, 0.0
        %262 = vst.msk [vmem:[%s230 + $0x48] sm:$0xff] %vm236, 0.0
        %263 = vst.msk [vmem:[%s230 + $0x50] sm:$0xff] %vm236, 0.0
        %264 = vst.msk [vmem:[%s230 + $0x58] sm:$0xff] %vm236, 0.0
        %265 = vst.msk [vmem:[%s230 + $0x60] sm:$0xff] %vm236, 0.0
        %266 = vst.msk [vmem:[%s230 + $0x68] sm:$0xff] %vm236, 0.0
        %267 = vst.msk [vmem:[%s230 + $0x70] sm:$0xff] %vm236, 0.0
        %268 = vst.msk [vmem:[%s230 + $0x78] sm:$0xff] %vm236, 0.0
      $region36: #{mlp_forward.2} parent=31 // pred_fallthru
        _
      %v269 = vld [vmem:[%s218] sm:$0x1]
      %v270 = vld [vmem:[%s1] sm:$0xff]
      %v271 = vld [vmem:[%s1 + $0x8] sm:$0xff]
      %v272 = vld [vmem:[%s1 + $0x10] sm:$0xff]
      %v273 = vld [vmem:[%s1 + $0x18] sm:$0xff]
      %v274 = vld [vmem:[%s1 + $0x20] sm:$0xff]
      %v275 = vld [vmem:[%s1 + $0x28] sm:$0xff]
      %v276 = vld [vmem:[%s1 + $0x30] sm:$0xff]
      %v277 = vld [vmem:[%s1 + $0x38] sm:$0xff]
      %v278 = vld [vmem:[%s1 + $0x40] sm:$0xff]
      %v279 = vld [vmem:[%s1 + $0x48] sm:$0xff]
      %v280 = vld [vmem:[%s1 + $0x50] sm:$0xff]
      %v281 = vld [vmem:[%s1 + $0x58] sm:$0xff]
      %v282 = vld [vmem:[%s1 + $0x60] sm:$0xff]
      %v283 = vld [vmem:[%s1 + $0x68] sm:$0xff]
      %v284 = vld [vmem:[%s1 + $0x70] sm:$0xff]
      %v285 = vld [vmem:[%s1 + $0x78] sm:$0xff]
      %287 = vset.pattern.permute.xlu0 0
      %288 = vperm.xlu0 %287, %v270
      %v289 = vpop.permute.xlu0 %288
      %292 = vset.pattern.permute.xlu0 0
      %293 = vperm.xlu0 %292, %v271
      %v294 = vpop.permute.xlu0 %293
      %297 = vset.pattern.permute.xlu0 0
      %298 = vperm.xlu0 %297, %v272
      %v299 = vpop.permute.xlu0 %298
      %302 = vset.pattern.permute.xlu0 0
      %303 = vperm.xlu0 %302, %v273
      %v304 = vpop.permute.xlu0 %303
      %307 = vset.pattern.permute.xlu0 0
      %308 = vperm.xlu0 %307, %v274
      %v309 = vpop.permute.xlu0 %308
      %312 = vset.pattern.permute.xlu0 0
      %313 = vperm.xlu0 %312, %v275
      %v314 = vpop.permute.xlu0 %313
      %317 = vset.pattern.permute.xlu0 0
      %318 = vperm.xlu0 %317, %v276
      %v319 = vpop.permute.xlu0 %318
      %322 = vset.pattern.permute.xlu0 0
      %323 = vperm.xlu0 %322, %v277
      %v324 = vpop.permute.xlu0 %323
      %327 = vset.pattern.permute.xlu0 0
      %328 = vperm.xlu0 %327, %v278
      %v329 = vpop.permute.xlu0 %328
      %332 = vset.pattern.permute.xlu0 0
      %333 = vperm.xlu0 %332, %v279
      %v334 = vpop.permute.xlu0 %333
      %337 = vset.pattern.permute.xlu0 0
      %338 = vperm.xlu0 %337, %v280
      %v339 = vpop.permute.xlu0 %338
      %342 = vset.pattern.permute.xlu0 0
      %343 = vperm.xlu0 %342, %v281
      %v344 = vpop.permute.xlu0 %343
      %347 = vset.pattern.permute.xlu0 0
      %348 = vperm.xlu0 %347, %v282
      %v349 = vpop.permute.xlu0 %348
      %352 = vset.pattern.permute.xlu0 0
      %353 = vperm.xlu0 %352, %v283
      %v354 = vpop.permute.xlu0 %353
      %357 = vset.pattern.permute.xlu0 0
      %358 = vperm.xlu0 %357, %v284
      %v359 = vpop.permute.xlu0 %358
      %362 = vset.pattern.permute.xlu0 0
      %363 = vperm.xlu0 %362, %v285
      %v364 = vpop.permute.xlu0 %363
      %v367 = vlaneseq
      %v368 = vshrl.u32 %v367, 7
      %v369 = vsub.s32 0, %v368
      %v370 = vrot.slane %v269, %v369
      %v372 = vmul.f32 %v289, %v370
      %v373 = vmul.f32 %v294, %v370
      %v374 = vmul.f32 %v299, %v370
      %v375 = vmul.f32 %v304, %v370
      %v376 = vmul.f32 %v309, %v370
      %v377 = vmul.f32 %v314, %v370
      %v378 = vmul.f32 %v319, %v370
      %v379 = vmul.f32 %v324, %v370
      %v380 = vmul.f32 %v329, %v370
      %v381 = vmul.f32 %v334, %v370
      %v382 = vmul.f32 %v339, %v370
      %v383 = vmul.f32 %v344, %v370
      %v384 = vmul.f32 %v349, %v370
      %v385 = vmul.f32 %v354, %v370
      %v386 = vmul.f32 %v359, %v370
      %v387 = vmul.f32 %v364, %v370
      %388 = vset.pattern.permute.xlu0 1
      %389 = vperm.xlu0 %388, %v270
      %v390 = vpop.permute.xlu0 %389
      %392 = vset.pattern.permute.xlu0 1
      %393 = vperm.xlu0 %392, %v271
      %v394 = vpop.permute.xlu0 %393
      %396 = vset.pattern.permute.xlu0 1
      %397 = vperm.xlu0 %396, %v272
      %v398 = vpop.permute.xlu0 %397
      %400 = vset.pattern.permute.xlu0 1
      %401 = vperm.xlu0 %400, %v273
      %v402 = vpop.permute.xlu0 %401
      %404 = vset.pattern.permute.xlu0 1
      %405 = vperm.xlu0 %404, %v274
      %v406 = vpop.permute.xlu0 %405
      %408 = vset.pattern.permute.xlu0 1
      %409 = vperm.xlu0 %408, %v275
      %v410 = vpop.permute.xlu0 %409
      %412 = vset.pattern.permute.xlu0 1
      %413 = vperm.xlu0 %412, %v276
      %v414 = vpop.permute.xlu0 %413
      %416 = vset.pattern.permute.xlu0 1
      %417 = vperm.xlu0 %416, %v277
      %v418 = vpop.permute.xlu0 %417
      %420 = vset.pattern.permute.xlu0 1
      %421 = vperm.xlu0 %420, %v278
      %v422 = vpop.permute.xlu0 %421
      %424 = vset.pattern.permute.xlu0 1
      %425 = vperm.xlu0 %424, %v279
      %v426 = vpop.permute.xlu0 %425
      %428 = vset.pattern.permute.xlu0 1
      %429 = vperm.xlu0 %428, %v280
      %v430 = vpop.permute.xlu0 %429
      %432 = vset.pattern.permute.xlu0 1
      %433 = vperm.xlu0 %432, %v281
      %v434 = vpop.permute.xlu0 %433
      %436 = vset.pattern.permute.xlu0 1
      %437 = vperm.xlu0 %436, %v282
      %v438 = vpop.permute.xlu0 %437
      %440 = vset.pattern.permute.xlu0 1
      %441 = vperm.xlu0 %440, %v283
      %v442 = vpop.permute.xlu0 %441
      %444 = vset.pattern.permute.xlu0 1
      %445 = vperm.xlu0 %444, %v284
      %v446 = vpop.permute.xlu0 %445
      %448 = vset.pattern.permute.xlu0 1
      %449 = vperm.xlu0 %448, %v285
      %v450 = vpop.permute.xlu0 %449
      %v452 = vadd.f32 %v372, %v390
      %v453 = vadd.f32 %v373, %v394
      %v454 = vadd.f32 %v374, %v398
      %v455 = vadd.f32 %v375, %v402
      %v456 = vadd.f32 %v376, %v406
      %v457 = vadd.f32 %v377, %v410
      %v458 = vadd.f32 %v378, %v414
      %v459 = vadd.f32 %v379, %v418
      %v460 = vadd.f32 %v380, %v422
      %v461 = vadd.f32 %v381, %v426
      %v462 = vadd.f32 %v382, %v430
      %v463 = vadd.f32 %v383, %v434
      %v464 = vadd.f32 %v384, %v438
      %v465 = vadd.f32 %v385, %v442
      %v466 = vadd.f32 %v386, %v446
      %v467 = vadd.f32 %v387, %v450
      %v468 = vmax.f32 %v452, 0.0
      %v469 = vmax.f32 %v453, 0.0
      %v470 = vmax.f32 %v454, 0.0
      %v471 = vmax.f32 %v455, 0.0
      %v472 = vmax.f32 %v456, 0.0
      %v473 = vmax.f32 %v457, 0.0
      %v474 = vmax.f32 %v458, 0.0
      %v475 = vmax.f32 %v459, 0.0
      %v476 = vmax.f32 %v460, 0.0
      %v477 = vmax.f32 %v461, 0.0
      %v478 = vmax.f32 %v462, 0.0
      %v479 = vmax.f32 %v463, 0.0
      %v480 = vmax.f32 %v464, 0.0
      %v481 = vmax.f32 %v465, 0.0
      %v482 = vmax.f32 %v466, 0.0
      %v483 = vmax.f32 %v467, 0.0
      %s484 = smul.u32 %s20, 2
      %s485 = sadd.s32 %s484, %s21
      %s486 = smul.u32 %s485, 128
      %v487 = vlaneseq
      %v488 = vand.u32 %v487, 127
      %v489 = vstv %s486
      %v490 = vadd.s32 %v489, %v488
      %vm491 = vcmp.lt.s32.totalorder %v490, 300
      %v492 = vsel %vm491, 1, 0
      %v493 = vcvt.s32.f32 %v492
      %v494 = vmul.f32 %v468, %v493
      %v495 = vmul.f32 %v469, %v493
      %v496 = vmul.f32 %v470, %v493
      %v497 = vmul.f32 %v471, %v493
      %v498 = vmul.f32 %v472, %v493
      %v499 = vmul.f32 %v473, %v493
      %v500 = vmul.f32 %v474, %v493
      %v501 = vmul.f32 %v475, %v493
      %v502 = vmul.f32 %v476, %v493
      %v503 = vmul.f32 %v477, %v493
      %v504 = vmul.f32 %v478, %v493
      %v505 = vmul.f32 %v479, %v493
      %v506 = vmul.f32 %v480, %v493
      %v507 = vmul.f32 %v481, %v493
      %v508 = vmul.f32 %v482, %v493
      %v509 = vmul.f32 %v483, %v493
      %v510 = vld [vmem:[%s2] sm:$0xf]
      %v511 = vld [vmem:[%s2 + $0x4] sm:$0xf]
      %v512 = vld [vmem:[%s2 + $0x8] sm:$0xf]
      %v513 = vld [vmem:[%s2 + $0xc] sm:$0xf]
      %v514 = vld [vmem:[%s2 + $0x10] sm:$0xf]
      %v515 = vld [vmem:[%s2 + $0x14] sm:$0xf]
      %v516 = vld [vmem:[%s2 + $0x18] sm:$0xf]
      %v517 = vld [vmem:[%s2 + $0x1c] sm:$0xf]
      %v518 = vld [vmem:[%s2 + $0x20] sm:$0xf]
      %v519 = vld [vmem:[%s2 + $0x24] sm:$0xf]
      %v520 = vld [vmem:[%s2 + $0x28] sm:$0xf]
      %v521 = vld [vmem:[%s2 + $0x2c] sm:$0xf]
      %v522 = vld [vmem:[%s2 + $0x30] sm:$0xf]
      %v523 = vld [vmem:[%s2 + $0x34] sm:$0xf]
      %v524 = vld [vmem:[%s2 + $0x38] sm:$0xf]
      %v525 = vld [vmem:[%s2 + $0x3c] sm:$0xf]
      %v526 = vpack.c.bf16 %v495, %v494
      %v527 = vpack.c.bf16 %v497, %v496
      %v528 = vpack.c.bf16 %v499, %v498
      %v529 = vpack.c.bf16 %v501, %v500
      %v530 = vpack.c.bf16 %v503, %v502
      %v531 = vpack.c.bf16 %v505, %v504
      %v532 = vpack.c.bf16 %v507, %v506
      %v533 = vpack.c.bf16 %v509, %v508
      %v550 = vunpack.c.l.b16 %v510
      %v551 = vunpack.c.l.b16 %v511
      %v552 = vunpack.c.l.b16 %v512
      %v553 = vunpack.c.l.b16 %v513
      %v554 = vunpack.c.l.b16 %v514
      %v555 = vunpack.c.l.b16 %v515
      %v556 = vunpack.c.l.b16 %v516
      %v557 = vunpack.c.l.b16 %v517
      %v558 = vunpack.c.l.b16 %v518
      %v559 = vunpack.c.l.b16 %v519
      %v560 = vunpack.c.l.b16 %v520
      %v561 = vunpack.c.l.b16 %v521
      %v562 = vunpack.c.l.b16 %v522
      %v563 = vunpack.c.l.b16 %v523
      %v564 = vunpack.c.l.b16 %v524
      %v565 = vunpack.c.l.b16 %v525
      %v566 = vpack.c.b16 %v551, %v550
      %v567 = vpack.c.b16 %v553, %v552
      %v568 = vpack.c.b16 %v555, %v554
      %v569 = vpack.c.b16 %v557, %v556
      %v570 = vpack.c.b16 %v559, %v558
      %v571 = vpack.c.b16 %v561, %v560
      %v572 = vpack.c.b16 %v563, %v562
      %v573 = vpack.c.b16 %v565, %v564
      %582 = vmatprep.subr.bf16.mxu0 0
      %583 = vmatpush1.bf16.msra.mxu0 %v533
      %584 = vmatprep.subr.bf16.mxu0 0
      %585 = vmatpush1.bf16.msra.mxu0 %v532
      %586 = vmatprep.subr.bf16.mxu0 0
      %587 = vmatpush1.bf16.msra.mxu0 %v531
      %588 = vmatprep.subr.bf16.mxu0 0
      %589 = vmatpush1.bf16.msra.mxu0 %v530
      %590 = vmatprep.subr.bf16.mxu0 0
      %591 = vmatpush1.bf16.msra.mxu0 %v529
      %592 = vmatprep.subr.bf16.mxu0 0
      %593 = vmatpush1.bf16.msra.mxu0 %v528
      %594 = vmatprep.subr.bf16.mxu0 0
      %595 = vmatpush1.bf16.msra.mxu0 %v527
      %596 = vmatprep.subr.bf16.mxu0 0
      %597 = vmatpush1.bf16.msra.mxu0 %v526
      %598 = vmatprep.subr.bf16.mxu0 0
      %599 = vmatpush2.bf16.msra.mxu0 0
      %600 = vmatprep.subr.bf16.mxu0 0
      %601 = vmatpush2.bf16.msra.mxu0 0
      %602 = vmatprep.subr.bf16.mxu0 0
      %603 = vmatpush2.bf16.msra.mxu0 0
      %604 = vmatprep.subr.bf16.mxu0 0
      %605 = vmatpush2.bf16.msra.mxu0 0
      %606 = vmatprep.subr.bf16.mxu0 0
      %607 = vmatpush2.bf16.msra.mxu0 0
      %608 = vmatprep.subr.bf16.mxu0 0
      %609 = vmatpush2.bf16.msra.mxu0 0
      %610 = vmatprep.subr.bf16.mxu0 0
      %611 = vmatpush2.bf16.msra.mxu0 0
      %612 = vmatprep.subr.bf16.mxu0 0
      %613 = vmatpush2.bf16.msra.mxu0 0
      %614 = vmatprep.mubr.bf16.mxu0 0
      %615 = vmatmul.mubr.bf16.gmra.mxu0 %v566
      %v616 = vpop.f32.mrf.mxu0
      %v617 = vadd.f32 0.0, %v616
      %v618 = vpop.f32.mrf.mxu0
      %v619 = vpop.f32.mrf.mxu0
      %v620 = vadd.f32 0.0, %v619
      %v621 = vpop.f32.mrf.mxu0
      %622 = vmatprep.mubr.bf16.mxu0 0
      %623 = vmatmul.mubr.bf16.gmra.mxu0 %v567
      %v624 = vpop.f32.mrf.mxu0
      %v625 = vadd.f32 0.0, %v624
      %v626 = vpop.f32.mrf.mxu0
      %v627 = vpop.f32.mrf.mxu0
      %v628 = vadd.f32 0.0, %v627
      %v629 = vpop.f32.mrf.mxu0
      %630 = vmatprep.mubr.bf16.mxu0 0
      %631 = vmatmul.mubr.bf16.gmra.mxu0 %v568
      %v632 = vpop.f32.mrf.mxu0
      %v633 = vadd.f32 0.0, %v632
      %v634 = vpop.f32.mrf.mxu0
      %v635 = vpop.f32.mrf.mxu0
      %v636 = vadd.f32 0.0, %v635
      %v637 = vpop.f32.mrf.mxu0
      %638 = vmatprep.mubr.bf16.mxu0 0
      %639 = vmatmul.mubr.bf16.gmra.mxu0 %v569
      %v640 = vpop.f32.mrf.mxu0
      %v641 = vadd.f32 0.0, %v640
      %v642 = vpop.f32.mrf.mxu0
      %v643 = vpop.f32.mrf.mxu0
      %v644 = vadd.f32 0.0, %v643
      %v645 = vpop.f32.mrf.mxu0
      %646 = vmatprep.mubr.bf16.mxu0 0
      %647 = vmatmul.mubr.bf16.gmra.mxu0 %v570
      %v648 = vpop.f32.mrf.mxu0
      %v649 = vadd.f32 0.0, %v648
      %v650 = vpop.f32.mrf.mxu0
      %v651 = vpop.f32.mrf.mxu0
      %v652 = vadd.f32 0.0, %v651
      %v653 = vpop.f32.mrf.mxu0
      %654 = vmatprep.mubr.bf16.mxu0 0
      %655 = vmatmul.mubr.bf16.gmra.mxu0 %v571
      %v656 = vpop.f32.mrf.mxu0
      %v657 = vadd.f32 0.0, %v656
      %v658 = vpop.f32.mrf.mxu0
      %v659 = vpop.f32.mrf.mxu0
      %v660 = vadd.f32 0.0, %v659
      %v661 = vpop.f32.mrf.mxu0
      %662 = vmatprep.mubr.bf16.mxu0 0
      %663 = vmatmul.mubr.bf16.gmra.mxu0 %v572
      %v664 = vpop.f32.mrf.mxu0
      %v665 = vadd.f32 0.0, %v664
      %v666 = vpop.f32.mrf.mxu0
      %v667 = vpop.f32.mrf.mxu0
      %v668 = vadd.f32 0.0, %v667
      %v669 = vpop.f32.mrf.mxu0
      %670 = vmatprep.mubr.bf16.mxu0 0
      %671 = vmatmul.mubr.bf16.gmra.mxu0 %v573
      %v672 = vpop.f32.mrf.mxu0
      %v673 = vadd.f32 0.0, %v672
      %v674 = vpop.f32.mrf.mxu0
      %v675 = vpop.f32.mrf.mxu0
      %v676 = vadd.f32 0.0, %v675
      %v677 = vpop.f32.mrf.mxu0
      %678 = vdwg.mxu0
      %v679 = vld [vmem:[%s225] sm:$0xff]
      %v680 = vld [vmem:[%s225 + $0x8] sm:$0xff]
      %v681 = vld [vmem:[%s225 + $0x10] sm:$0xff]
      %v682 = vld [vmem:[%s225 + $0x18] sm:$0xff]
      %v683 = vld [vmem:[%s225 + $0x20] sm:$0xff]
      %v684 = vld [vmem:[%s225 + $0x28] sm:$0xff]
      %v685 = vld [vmem:[%s225 + $0x30] sm:$0xff]
      %v686 = vld [vmem:[%s225 + $0x38] sm:$0xff]
      %v687 = vld [vmem:[%s225 + $0x40] sm:$0xff]
      %v688 = vld [vmem:[%s225 + $0x48] sm:$0xff]
      %v689 = vld [vmem:[%s225 + $0x50] sm:$0xff]
      %v690 = vld [vmem:[%s225 + $0x58] sm:$0xff]
      %v691 = vld [vmem:[%s225 + $0x60] sm:$0xff]
      %v692 = vld [vmem:[%s225 + $0x68] sm:$0xff]
      %v693 = vld [vmem:[%s225 + $0x70] sm:$0xff]
      %v694 = vld [vmem:[%s225 + $0x78] sm:$0xff]
      %695 = vadd.xlane.f32.xlu0 %v617
      %v696 = vpop.xlane.xlu0 %695
      %697 = vadd.xlane.f32.xlu0 %v620
      %v698 = vpop.xlane.xlu0 %697
      %699 = vadd.xlane.f32.xlu0 %v625
      %v700 = vpop.xlane.xlu0 %699
      %701 = vadd.xlane.f32.xlu0 %v628
      %v702 = vpop.xlane.xlu0 %701
      %703 = vadd.xlane.f32.xlu0 %v633
      %v704 = vpop.xlane.xlu0 %703
      %705 = vadd.xlane.f32.xlu0 %v636
      %v706 = vpop.xlane.xlu0 %705
      %707 = vadd.xlane.f32.xlu0 %v641
      %v708 = vpop.xlane.xlu0 %707
      %709 = vadd.xlane.f32.xlu0 %v644
      %v710 = vpop.xlane.xlu0 %709
      %711 = vadd.xlane.f32.xlu0 %v649
      %v712 = vpop.xlane.xlu0 %711
      %713 = vadd.xlane.f32.xlu0 %v652
      %v714 = vpop.xlane.xlu0 %713
      %715 = vadd.xlane.f32.xlu0 %v657
      %v716 = vpop.xlane.xlu0 %715
      %717 = vadd.xlane.f32.xlu0 %v660
      %v718 = vpop.xlane.xlu0 %717
      %719 = vadd.xlane.f32.xlu0 %v665
      %v720 = vpop.xlane.xlu0 %719
      %721 = vadd.xlane.f32.xlu0 %v668
      %v722 = vpop.xlane.xlu0 %721
      %723 = vadd.xlane.f32.xlu0 %v673
      %v724 = vpop.xlane.xlu0 %723
      %725 = vadd.xlane.f32.xlu0 %v676
      %v726 = vpop.xlane.xlu0 %725
      %v727 = vadd.f32 %v679, %v696
      %v728 = vadd.f32 %v680, %v698
      %v729 = vadd.f32 %v681, %v700
      %v730 = vadd.f32 %v682, %v702
      %v731 = vadd.f32 %v683, %v704
      %v732 = vadd.f32 %v684, %v706
      %v733 = vadd.f32 %v685, %v708
      %v734 = vadd.f32 %v686, %v710
      %v735 = vadd.f32 %v687, %v712
      %v736 = vadd.f32 %v688, %v714
      %v737 = vadd.f32 %v689, %v716
      %v738 = vadd.f32 %v690, %v718
      %v739 = vadd.f32 %v691, %v720
      %v740 = vadd.f32 %v692, %v722
      %v741 = vadd.f32 %v693, %v724
      %v742 = vadd.f32 %v694, %v726
      %vm743 = vcmask 7168
      %744 = vst.msk [vmem:[%s225] sm:$0xff] %vm743, %v727
      %745 = vst.msk [vmem:[%s225 + $0x8] sm:$0xff] %vm743, %v728
      %746 = vst.msk [vmem:[%s225 + $0x10] sm:$0xff] %vm743, %v729
      %747 = vst.msk [vmem:[%s225 + $0x18] sm:$0xff] %vm743, %v730
      %748 = vst.msk [vmem:[%s225 + $0x20] sm:$0xff] %vm743, %v731
      %749 = vst.msk [vmem:[%s225 + $0x28] sm:$0xff] %vm743, %v732
      %750 = vst.msk [vmem:[%s225 + $0x30] sm:$0xff] %vm743, %v733
      %751 = vst.msk [vmem:[%s225 + $0x38] sm:$0xff] %vm743, %v734
      %752 = vst.msk [vmem:[%s225 + $0x40] sm:$0xff] %vm743, %v735
      %753 = vst.msk [vmem:[%s225 + $0x48] sm:$0xff] %vm743, %v736
      %754 = vst.msk [vmem:[%s225 + $0x50] sm:$0xff] %vm743, %v737
      %755 = vst.msk [vmem:[%s225 + $0x58] sm:$0xff] %vm743, %v738
      %756 = vst.msk [vmem:[%s225 + $0x60] sm:$0xff] %vm743, %v739
      %757 = vst.msk [vmem:[%s225 + $0x68] sm:$0xff] %vm743, %v740
      %758 = vst.msk [vmem:[%s225 + $0x70] sm:$0xff] %vm743, %v741
      %759 = vst.msk [vmem:[%s225 + $0x78] sm:$0xff] %vm743, %v742
      %v760 = vld [vmem:[%s230] sm:$0xff]
      %v761 = vld [vmem:[%s230 + $0x8] sm:$0xff]
      %v762 = vld [vmem:[%s230 + $0x10] sm:$0xff]
      %v763 = vld [vmem:[%s230 + $0x18] sm:$0xff]
      %v764 = vld [vmem:[%s230 + $0x20] sm:$0xff]
      %v765 = vld [vmem:[%s230 + $0x28] sm:$0xff]
      %v766 = vld [vmem:[%s230 + $0x30] sm:$0xff]
      %v767 = vld [vmem:[%s230 + $0x38] sm:$0xff]
      %v768 = vld [vmem:[%s230 + $0x40] sm:$0xff]
      %v769 = vld [vmem:[%s230 + $0x48] sm:$0xff]
      %v770 = vld [vmem:[%s230 + $0x50] sm:$0xff]
      %v771 = vld [vmem:[%s230 + $0x58] sm:$0xff]
      %v772 = vld [vmem:[%s230 + $0x60] sm:$0xff]
      %v773 = vld [vmem:[%s230 + $0x68] sm:$0xff]
      %v774 = vld [vmem:[%s230 + $0x70] sm:$0xff]
      %v775 = vld [vmem:[%s230 + $0x78] sm:$0xff]
      %v776 = vmul.f32 %v617, %v617
      %v777 = vmul.f32 %v620, %v620
      %v778 = vmul.f32 %v625, %v625
      %v779 = vmul.f32 %v628, %v628
      %v780 = vmul.f32 %v633, %v633
      %v781 = vmul.f32 %v636, %v636
      %v782 = vmul.f32 %v641, %v641
      %v783 = vmul.f32 %v644, %v644
      %v784 = vmul.f32 %v649, %v649
      %v785 = vmul.f32 %v652, %v652
      %v786 = vmul.f32 %v657, %v657
      %v787 = vmul.f32 %v660, %v660
      %v788 = vmul.f32 %v665, %v665
      %v789 = vmul.f32 %v668, %v668
      %v790 = vmul.f32 %v673, %v673
      %v791 = vmul.f32 %v676, %v676
      %792 = vadd.xlane.f32.xlu0 %v776
      %v793 = vpop.xlane.xlu0 %792
      %794 = vadd.xlane.f32.xlu0 %v777
      %v795 = vpop.xlane.xlu0 %794
      %796 = vadd.xlane.f32.xlu0 %v778
      %v797 = vpop.xlane.xlu0 %796
      %798 = vadd.xlane.f32.xlu0 %v779
      %v799 = vpop.xlane.xlu0 %798
      %800 = vadd.xlane.f32.xlu0 %v780
      %v801 = vpop.xlane.xlu0 %800
      %802 = vadd.xlane.f32.xlu0 %v781
      %v803 = vpop.xlane.xlu0 %802
      %804 = vadd.xlane.f32.xlu0 %v782
      %v805 = vpop.xlane.xlu0 %804
      %806 = vadd.xlane.f32.xlu0 %v783
      %v807 = vpop.xlane.xlu0 %806
      %808 = vadd.xlane.f32.xlu0 %v784
      %v809 = vpop.xlane.xlu0 %808
      %810 = vadd.xlane.f32.xlu0 %v785
      %v811 = vpop.xlane.xlu0 %810
      %812 = vadd.xlane.f32.xlu0 %v786
      %v813 = vpop.xlane.xlu0 %812
      %814 = vadd.xlane.f32.xlu0 %v787
      %v815 = vpop.xlane.xlu0 %814
      %816 = vadd.xlane.f32.xlu0 %v788
      %v817 = vpop.xlane.xlu0 %816
      %818 = vadd.xlane.f32.xlu0 %v789
      %v819 = vpop.xlane.xlu0 %818
      %820 = vadd.xlane.f32.xlu0 %v790
      %v821 = vpop.xlane.xlu0 %820
      %822 = vadd.xlane.f32.xlu0 %v791
      %v823 = vpop.xlane.xlu0 %822
      %v824 = vadd.f32 %v760, %v793
      %v825 = vadd.f32 %v761, %v795
      %v826 = vadd.f32 %v762, %v797
      %v827 = vadd.f32 %v763, %v799
      %v828 = vadd.f32 %v764, %v801
      %v829 = vadd.f32 %v765, %v803
      %v830 = vadd.f32 %v766, %v805
      %v831 = vadd.f32 %v767, %v807
      %v832 = vadd.f32 %v768, %v809
      %v833 = vadd.f32 %v769, %v811
      %v834 = vadd.f32 %v770, %v813
      %v835 = vadd.f32 %v771, %v815
      %v836 = vadd.f32 %v772, %v817
      %v837 = vadd.f32 %v773, %v819
      %v838 = vadd.f32 %v774, %v821
      %v839 = vadd.f32 %v775, %v823
      %840 = vst.msk [vmem:[%s230] sm:$0xff] %vm743, %v824
      %841 = vst.msk [vmem:[%s230 + $0x8] sm:$0xff] %vm743, %v825
      %842 = vst.msk [vmem:[%s230 + $0x10] sm:$0xff] %vm743, %v826
      %843 = vst.msk [vmem:[%s230 + $0x18] sm:$0xff] %vm743, %v827
      %844 = vst.msk [vmem:[%s230 + $0x20] sm:$0xff] %vm743, %v828
      %845 = vst.msk [vmem:[%s230 + $0x28] sm:$0xff] %vm743, %v829
      %846 = vst.msk [vmem:[%s230 + $0x30] sm:$0xff] %vm743, %v830
      %847 = vst.msk [vmem:[%s230 + $0x38] sm:$0xff] %vm743, %v831
      %848 = vst.msk [vmem:[%s230 + $0x40] sm:$0xff] %vm743, %v832
      %849 = vst.msk [vmem:[%s230 + $0x48] sm:$0xff] %vm743, %v833
      %850 = vst.msk [vmem:[%s230 + $0x50] sm:$0xff] %vm743, %v834
      %851 = vst.msk [vmem:[%s230 + $0x58] sm:$0xff] %vm743, %v835
      %852 = vst.msk [vmem:[%s230 + $0x60] sm:$0xff] %vm743, %v836
      %853 = vst.msk [vmem:[%s230 + $0x68] sm:$0xff] %vm743, %v837
      %854 = vst.msk [vmem:[%s230 + $0x70] sm:$0xff] %vm743, %v838
      %855 = vst.msk [vmem:[%s230 + $0x78] sm:$0xff] %vm743, %v839
      %p856 = scmp.lt.s32.totalorder %s20, 1
      %s857 = scalar_select %p856, %s20, 1
      %s858 = smul.addr %s857, 16
      %s859 = smul.addr %s858, 8
      %s860 = scalar_lea.vmem %s3, %s859
      %p861 = scmp.lt.s32.totalorder %s20, 1
      %s862 = scalar_select %p861, %s20, 1
      %s863 = smul.addr %s862, 16
      %s864 = smul.addr %s863, 8
      %s865 = scalar_lea.vmem %s4, %s864
      // Predicated region
      $region37: #{mlp_forward.2} parent=31 // pred_check
        %p866 = pneg %p118
      $region38: #{mlp_forward.2} parent=31 // pred_check_branch
        %868 = sbr.rel (%p866) target = $region40
      $region39: #{mlp_forward.2} parent=31 // pred_region
        _
      $region40: #{mlp_forward.2} parent=31 // pred_fallthru
        _
      // Predicated region
      $region41: #{mlp_forward.2} parent=31 // pred_check
        %p869 = pneg %p144
      $region42: #{mlp_forward.2} parent=31 // pred_check_branch
        %871 = sbr.rel (%p869) target = $region44
      $region43: #{mlp_forward.2} parent=31 // pred_region
        _
      $region44: #{mlp_forward.2} parent=31 // pred_fallthru
        _
    $region32: #{mlp_forward.2} parent=5 // pred_fallthru
      _
    %p872 = scmp.le.s32.totalorder 2, %s11
    // Predicated region
    $region45: #{mlp_forward.2} parent=5 // pred_check
      %p873 = pneg %p872
    $region46: #{mlp_forward.2} parent=5 // pred_check_branch
      %875 = sbr.rel (%p873) target = $region48
    $region47: #{mlp_forward.2} parent=5 // pred_region
      %s876 = ssub.s32 %s11, 2
      // Predicated region
      $region49: #{mlp_forward.2} parent=47 // pred_check
        %p877 = pneg %p124
      $region50: #{mlp_forward.2} parent=47 // pred_check_branch
        %879 = sbr.rel (%p877) target = $region52
      $region51: #{mlp_forward.2} parent=47 // pred_region
        %p880 = scmp.lt.s32.totalorder %s22, 1
        %s881 = scalar_select %p880, %s22, 1
        %s882 = smul.addr %s881, 16
        %s883 = smul.addr %s882, 8
        %s884 = scalar_lea.vmem %s3, %s883
      $region52: #{mlp_forward.2} parent=47 // pred_fallthru
        _
      // Predicated region
      $region53: #{mlp_forward.2} parent=47 // pred_check
        %p885 = pneg %p150
      $region54: #{mlp_forward.2} parent=47 // pred_check_branch
        %887 = sbr.rel (%p885) target = $region56
      $region55: #{mlp_forward.2} parent=47 // pred_region
        %p888 = scmp.lt.s32.totalorder %s22, 1
        %s889 = scalar_select %p888, %s22, 1
        %s890 = smul.addr %s889, 16
        %s891 = smul.addr %s890, 8
        %s892 = scalar_lea.vmem %s4, %s891
      $region56: #{mlp_forward.2} parent=47 // pred_fallthru
        _
    $region48: #{mlp_forward.2} parent=5 // pred_fallthru
      _
  $region6: #{mlp_forward.2} parent=0 // loop_footer
    %s15 = sadd.s32 1, %s11
  $region7: #{mlp_forward.2} parent=0 // loop_footer_branch
    %10 = sbr.rel target = $region3
  $region8: #{mlp_forward.2} parent=0 // loop_exit
    _

</llo_original>
